<compile_context>
chip_gen: v7x
topology: tpu7x:2x2x1
jax: 0.10.0
libtpu: 0.0.40
codegen_flags: <defaults>
</compile_context>

<pallas_src>
import functools
import math

import jax
import jax.numpy as jnp
from jax.experimental import pallas as pl
from jax.experimental.pallas import tpu as pltpu


# ----------------------------------------------------------------------------
# helpers
# ----------------------------------------------------------------------------
def _pick_tile(dim, preferred, align):
    """Largest `align`-multiple divisor of `dim` <= preferred, else full dim."""
    if dim <= preferred:
        return dim
    t = (preferred // align) * align
    while t >= align:
        if dim % t == 0:
            return t
        t -= align
    return dim


def _apply_act(y, act):
    if act == "gelu":
        # tanh-approx GELU (BERT "gelu_new" form).
        return 0.5 * y * (1.0 + jnp.tanh(0.7978845608028654 * (y + 0.044715 * y * y * y)))
    if act == "relu":
        return jnp.maximum(y, 0.0)
    if act == "tanh":
        return jnp.tanh(y)
    return y


# ----------------------------------------------------------------------------
# tiled linear:  act(x @ w + b)      (bf16 operands, f32 accumulate)
# ----------------------------------------------------------------------------
def _linear_kernel(x_ref, w_ref, b_ref, o_ref, acc_ref, *, act):
    @pl.when(pl.program_id(2) == 0)
    def _():
        acc_ref[...] = jnp.zeros_like(acc_ref)

    acc_ref[...] += jnp.dot(x_ref[...], w_ref[...], preferred_element_type=jnp.float32)

    @pl.when(pl.program_id(2) == pl.num_programs(2) - 1)
    def _():
        y = _apply_act(acc_ref[...] + b_ref[...], act)
        o_ref[...] = y.astype(o_ref.dtype)


def linear(x, w, b, act="none", *, tm=256, tn=256, tk=512):
    M, K = x.shape
    K2, N = w.shape
    assert K == K2
    tm = _pick_tile(M, tm, 8)
    tn = _pick_tile(N, tn, 128)
    tk = _pick_tile(K, tk, 128)
    return pl.pallas_call(
        functools.partial(_linear_kernel, act=act),
        out_shape=jax.ShapeDtypeStruct((M, N), jnp.bfloat16),
        grid=(M // tm, N // tn, K // tk),
        in_specs=[
            pl.BlockSpec((tm, tk), lambda i, j, k: (i, k)),
            pl.BlockSpec((tk, tn), lambda i, j, k: (k, j)),
            pl.BlockSpec((1, tn), lambda i, j, k: (0, j)),
        ],
        out_specs=pl.BlockSpec((tm, tn), lambda i, j, k: (i, j)),
        scratch_shapes=[pltpu.VMEM((tm, tn), jnp.float32)],
        compiler_params=pltpu.CompilerParams(
            dimension_semantics=("parallel", "parallel", "arbitrary")),
    )(x, w, b.reshape(1, N))


# ----------------------------------------------------------------------------
# fused:  LayerNorm( x @ w + b + residual )        (K, N kept whole; K <= H)
# ----------------------------------------------------------------------------
def _linear_res_ln_kernel(x_ref, w_ref, b_ref, r_ref, g_ref, bt_ref, o_ref, *, eps):
    y = jnp.dot(x_ref[...], w_ref[...], preferred_element_type=jnp.float32)
    h = y + b_ref[...] + r_ref[...].astype(jnp.float32)
    mu = jnp.mean(h, axis=-1, keepdims=True)
    var = jnp.mean(jnp.square(h - mu), axis=-1, keepdims=True)
    o_ref[...] = ((h - mu) * jax.lax.rsqrt(var + eps) * g_ref[...] + bt_ref[...]
                  ).astype(o_ref.dtype)


def linear_residual_layernorm(x, w, b, res, gamma, beta, *, eps=1e-12, tm=256):
    M, K = x.shape
    _, N = w.shape
    tm = _pick_tile(M, tm, 8)
    return pl.pallas_call(
        functools.partial(_linear_res_ln_kernel, eps=eps),
        out_shape=jax.ShapeDtypeStruct((M, N), jnp.bfloat16),
        grid=(M // tm,),
        in_specs=[
            pl.BlockSpec((tm, K), lambda i: (i, 0)),
            pl.BlockSpec((K, N), lambda i: (0, 0)),
            pl.BlockSpec((1, N), lambda i: (0, 0)),
            pl.BlockSpec((tm, N), lambda i: (i, 0)),
            pl.BlockSpec((1, N), lambda i: (0, 0)),
            pl.BlockSpec((1, N), lambda i: (0, 0)),
        ],
        out_specs=pl.BlockSpec((tm, N), lambda i: (i, 0)),
        compiler_params=pltpu.CompilerParams(dimension_semantics=("parallel",)),
    )(x, w, b.reshape(1, N), res, gamma.reshape(1, N), beta.reshape(1, N))


# ----------------------------------------------------------------------------
# fused Pfeiffer adapter + LayerNorm:
#   LayerNorm( relu(ffn @ dw + db) @ uw + ub + ffn + res )
# ----------------------------------------------------------------------------
def _adapter_ln_kernel(ffn_ref, res_ref, dw_ref, db_ref, uw_ref, ub_ref,
                       g_ref, bt_ref, o_ref, *, eps):
    ffn = ffn_ref[...]
    ad = jnp.dot(ffn, dw_ref[...], preferred_element_type=jnp.float32) + db_ref[...]
    ad = jnp.maximum(ad, 0.0).astype(ffn.dtype)           # ReLU, back to bf16 for MXU
    up = jnp.dot(ad, uw_ref[...], preferred_element_type=jnp.float32) + ub_ref[...]
    h = up + ffn.astype(jnp.float32) + res_ref[...].astype(jnp.float32)
    mu = jnp.mean(h, axis=-1, keepdims=True)
    var = jnp.mean(jnp.square(h - mu), axis=-1, keepdims=True)
    o_ref[...] = ((h - mu) * jax.lax.rsqrt(var + eps) * g_ref[...] + bt_ref[...]
                  ).astype(o_ref.dtype)


def adapter_layernorm(ffn, res, dw, db, uw, ub, gamma, beta, *, eps=1e-12, tm=256):
    M, H = ffn.shape
    Bn = dw.shape[1]
    tm = _pick_tile(M, tm, 8)
    return pl.pallas_call(
        functools.partial(_adapter_ln_kernel, eps=eps),
        out_shape=jax.ShapeDtypeStruct((M, H), jnp.bfloat16),
        grid=(M // tm,),
        in_specs=[
            pl.BlockSpec((tm, H), lambda i: (i, 0)),
            pl.BlockSpec((tm, H), lambda i: (i, 0)),
            pl.BlockSpec((H, Bn), lambda i: (0, 0)),
            pl.BlockSpec((1, Bn), lambda i: (0, 0)),
            pl.BlockSpec((Bn, H), lambda i: (0, 0)),
            pl.BlockSpec((1, H), lambda i: (0, 0)),
            pl.BlockSpec((1, H), lambda i: (0, 0)),
            pl.BlockSpec((1, H), lambda i: (0, 0)),
        ],
        out_specs=pl.BlockSpec((tm, H), lambda i: (i, 0)),
        compiler_params=pltpu.CompilerParams(dimension_semantics=("parallel",)),
    )(ffn, res, dw, db.reshape(1, Bn), uw, ub.reshape(1, H),
      gamma.reshape(1, H), beta.reshape(1, H))


# ----------------------------------------------------------------------------
# plain LayerNorm (embeddings) — no dummy zero residual
# ----------------------------------------------------------------------------
def _ln_kernel(x_ref, g_ref, b_ref, o_ref, *, eps):
    h = x_ref[...].astype(jnp.float32)
    mu = jnp.mean(h, axis=-1, keepdims=True)
    var = jnp.mean(jnp.square(h - mu), axis=-1, keepdims=True)
    o_ref[...] = ((h - mu) * jax.lax.rsqrt(var + eps) * g_ref[...] + b_ref[...]
                  ).astype(o_ref.dtype)


def layernorm(x, gamma, beta, *, eps=1e-12, tm=256):
    M, H = x.shape
    tm = _pick_tile(M, tm, 8)
    return pl.pallas_call(
        functools.partial(_ln_kernel, eps=eps),
        out_shape=jax.ShapeDtypeStruct((M, H), jnp.bfloat16),
        grid=(M // tm,),
        in_specs=[
            pl.BlockSpec((tm, H), lambda i: (i, 0)),
            pl.BlockSpec((1, H), lambda i: (0, 0)),
            pl.BlockSpec((1, H), lambda i: (0, 0)),
        ],
        out_specs=pl.BlockSpec((tm, H), lambda i: (i, 0)),
        compiler_params=pltpu.CompilerParams(dimension_semantics=("parallel",)),
    )(x, gamma.reshape(1, H), beta.reshape(1, H))


# ----------------------------------------------------------------------------
# attention over the fused QKV tensor (no head split/merge transposes)
# ----------------------------------------------------------------------------
def _attn_kernel(qkv_ref, m_ref, o_ref, *, heads, dh, hidden):
    m = m_ref[0]                                            # [1, S] additive mask bias (f32)
    # TODO(synk): pack multiple heads per score matmul to widen the MXU
    #             contraction beyond Dh on v6e/v7x (256-wide MXU).
    for h in range(heads):                                  # static unroll over heads
        q = qkv_ref[0, :, h * dh:(h + 1) * dh]              # [S, Dh] (scale folded into Wq)
        k = qkv_ref[0, :, hidden + h * dh:hidden + (h + 1) * dh]
        v = qkv_ref[0, :, 2 * hidden + h * dh:2 * hidden + (h + 1) * dh]
        s = jax.lax.dot_general(q, k, (((1,), (1,)), ((), ())),
                                preferred_element_type=jnp.float32)   # q @ k.T -> [S, S]
        s = s + m
        s = s - jnp.max(s, axis=-1, keepdims=True)
        p = jnp.exp(s)
        p = p * pl.reciprocal(jnp.sum(p, axis=-1, keepdims=True), approx=True)
        o_ref[0, :, h * dh:(h + 1) * dh] = jnp.dot(
            p.astype(v.dtype), v, preferred_element_type=jnp.float32).astype(o_ref.dtype)


def attention(qkv, mask_bias, *, heads):
    B, S, threeH = qkv.shape
    H = threeH // 3
    dh = H // heads
    return pl.pallas_call(
        functools.partial(_attn_kernel, heads=heads, dh=dh, hidden=H),
        out_shape=jax.ShapeDtypeStruct((B, S, H), jnp.bfloat16),
        grid=(B,),
        in_specs=[
            pl.BlockSpec((1, S, threeH), lambda b: (b, 0, 0)),
            pl.BlockSpec((1, 1, S), lambda b: (b, 0, 0)),
        ],
        out_specs=pl.BlockSpec((1, S, H), lambda b: (b, 0, 0)),
        compiler_params=pltpu.CompilerParams(dimension_semantics=("parallel",)),
    )(qkv, mask_bias)


# ----------------------------------------------------------------------------
# Parameters (deterministic synthetic init — no checkpoint loading)
# ----------------------------------------------------------------------------
def init_params(key, *, vocab, hidden, heads, inter, num_layers, max_pos,
                num_classes, reduction_factor):
    bottleneck = hidden // reduction_factor
    dh = hidden // heads
    attn_scale = 1.0 / math.sqrt(dh)
    keys = iter(jax.random.split(key, 16 + 16 * num_layers))

    def nrm(shape):
        return jax.random.normal(next(keys), shape, jnp.float32) * 0.02

    def bf(a):
        return a.astype(jnp.bfloat16)

    params = {
        "word_emb": nrm((vocab, hidden)),
        "pos_emb": nrm((max_pos, hidden)),
        "type_emb": nrm((2, hidden)),
        "emb_ln_g": jnp.ones((hidden,), jnp.float32),
        "emb_ln_b": jnp.zeros((hidden,), jnp.float32),
        "layers": [],
        "pool_w": nrm((hidden, hidden)),
        "pool_b": jnp.zeros((hidden,), jnp.float32),
        "fc_w": nrm((hidden, num_classes)),
        "fc_b": jnp.zeros((num_classes,), jnp.float32),
    }
    for _ in range(num_layers):
        wq, wk, wv = nrm((hidden, hidden)), nrm((hidden, hidden)), nrm((hidden, hidden))
        bq = jnp.zeros((hidden,), jnp.float32)
        bk = jnp.zeros((hidden,), jnp.float32)
        bv = jnp.zeros((hidden,), jnp.float32)
        params["layers"].append({
            # fused QKV weight; the 1/sqrt(Dh) softmax scale is folded into the
            # Q projection (mathematically equivalent to scaling the scores).
            "wqkv": bf(jnp.concatenate([wq * attn_scale, wk, wv], axis=1)),
            "bqkv": jnp.concatenate([bq * attn_scale, bk, bv]),
            "wo": bf(nrm((hidden, hidden))), "bo": jnp.zeros((hidden,), jnp.float32),
            "ln1_g": jnp.ones((hidden,), jnp.float32),
            "ln1_b": jnp.zeros((hidden,), jnp.float32),
            "w1": bf(nrm((hidden, inter))), "b1": jnp.zeros((inter,), jnp.float32),
            "w2": bf(nrm((inter, hidden))), "b2": jnp.zeros((hidden,), jnp.float32),
            # Pfeiffer adapter (output adapter only, bottleneck = H / reduction_factor)
            "ad_dw": bf(nrm((hidden, bottleneck))),
            "ad_db": jnp.zeros((bottleneck,), jnp.float32),
            "ad_uw": bf(nrm((bottleneck, hidden))),
            "ad_ub": jnp.zeros((hidden,), jnp.float32),
            "ln2_g": jnp.ones((hidden,), jnp.float32),
            "ln2_b": jnp.zeros((hidden,), jnp.float32),
        })
    return params


# ----------------------------------------------------------------------------
# AdapterBert forward
# ----------------------------------------------------------------------------
def adapter_bert_forward(params, input_ids, token_type_ids, attention_mask,
                         *, heads, return_embeds=False):
    del token_type_ids  # the torch module calls bert(input_ids, attention_mask)
    #                     so token_type_ids never reaches BERT -> type-id 0 is used.
    B, S = input_ids.shape
    H = params["word_emb"].shape[1]
    M = B * S

    # --- embeddings (gathers are glue in plain JAX) ---
    we = params["word_emb"][input_ids]                                  # [B,S,H]
    pe = params["pos_emb"][jnp.arange(S)][None, :, :]                   # [1,S,H]
    te = params["type_emb"][0][None, None, :]                           # [1,1,H]
    emb = (we + pe + te).reshape(M, H)
    x = layernorm(emb, params["emb_ln_g"], params["emb_ln_b"])          # bf16 [M,H]

    # additive attention-mask bias, one row per batch (broadcast over heads in-kernel)
    mask_bias = ((1.0 - attention_mask.astype(jnp.float32)) * -1e9).reshape(B, 1, S)

    for lp in params["layers"]:
        # fused QKV projection (x read from HBM once)
        qkv = linear(x, lp["wqkv"], lp["bqkv"])                         # [M, 3H] bf16
        # scaled-dot-product attention, heads indexed inside the kernel
        ctx = attention(qkv.reshape(B, S, 3 * H), mask_bias, heads=heads)  # [B,S,H]
        # attention output projection + residual(x) + LayerNorm (fused epilogue)
        attn_out = linear_residual_layernorm(
            ctx.reshape(M, H), lp["wo"], lp["bo"], x, lp["ln1_g"], lp["ln1_b"])
        # feed-forward
        inter = linear(attn_out, lp["w1"], lp["b1"], act="gelu")
        ffn = linear(inter, lp["w2"], lp["b2"])
        # Pfeiffer adapter (down -> relu -> up -> +ffn) + residual(attn_out) + LN
        x = adapter_layernorm(ffn, attn_out, lp["ad_dw"], lp["ad_db"],
                              lp["ad_uw"], lp["ad_ub"], lp["ln2_g"], lp["ln2_b"])

    hseq = x.reshape(B, S, H)
    cls = hseq[:, 0, :].astype(jnp.float32)                             # [B,H]
    # pooler + classifier head: tiny shapes (num_classes < 128) -> plain XLA dots
    pooled = jnp.tanh(cls @ params["pool_w"] + params["pool_b"])        # pooler_output
    logits = pooled @ params["fc_w"] + params["fc_b"]                   # self.FC
    if return_embeds:
        return logits, [pooled.reshape(B, -1)]
    return logits


# ----------------------------------------------------------------------------
if __name__ == "__main__":
    B, S = 2, 8
    VOCAB, HIDDEN, HEADS, INTER = 128, 32, 4, 64
    NUM_LAYERS, MAX_POS, NUM_CLASSES, REDUCTION = 2, 64, 3, 2

    key = jax.random.PRNGKey(0)
    kp, kid = jax.random.split(key)
    params = init_params(kp, vocab=VOCAB, hidden=HIDDEN, heads=HEADS, inter=INTER,
                         num_layers=NUM_LAYERS, max_pos=MAX_POS,
                         num_classes=NUM_CLASSES, reduction_factor=REDUCTION)

    input_ids = jax.random.randint(kid, (B, S), 0, VOCAB, dtype=jnp.int32)
    token_type_ids = jnp.zeros((B, S), jnp.int32)
    attention_mask = jnp.ones((B, S), jnp.int32)

    fwd = jax.jit(functools.partial(adapter_bert_forward, heads=HEADS))
    out = fwd(params, input_ids, token_type_ids, attention_mask)
    jax.block_until_ready(out)
    assert out.shape == (B, NUM_CLASSES)
    print("KERNEL_OK")
</pallas_src>

<mosaic_0001>
module attributes {stable_mosaic.version = 11 : i64} {
  func.func @_ln_kernel(%arg0: i32, %arg1: memref<16x32xf32, #tpu.memory_space<vmem>>, %arg2: memref<1x32xf32, #tpu.memory_space<vmem>>, %arg3: memref<1x32xf32, #tpu.memory_space<vmem>>, %arg4: memref<16x32xbf16, #tpu.memory_space<vmem>>) attributes {dimension_semantics = [#tpu.dimension_semantics<parallel>], iteration_bounds = array<i64: 1>, scalar_prefetch = 0 : i64, scratch_operands = 0 : i64, tpu.core_type = #tpu.core_type<tc>, window_params = [{transform_indices = @transform_0, window_bounds = array<i64: 16, 32>}, {pipeline_mode = #tpu.pipeline_mode<synchronous>, transform_indices = @transform_1, window_bounds = array<i64: 1, 32>}, {pipeline_mode = #tpu.pipeline_mode<synchronous>, transform_indices = @transform_2, window_bounds = array<i64: 1, 32>}, {transform_indices = @transform_3, window_bounds = array<i64: 16, 32>}]} {
    %c0 = arith.constant 0 : index
    %c0_0 = arith.constant 0 : index
    %0 = vector.load %arg1[%c0, %c0_0] : memref<16x32xf32, #tpu.memory_space<vmem>>, vector<16x32xf32>
    %cst = arith.constant dense<0.000000e+00> : vector<16xf32>
    %1 = vector.multi_reduction <add>, %0, %cst [1] : vector<16x32xf32> to vector<16xf32>
    %2 = vector.shape_cast %1 : vector<16xf32> to vector<16x1xf32>
    %cst_1 = arith.constant 3.200000e+01 : f32
    %3 = vector.broadcast %cst_1 : f32 to vector<16x1xf32>
    %4 = arith.divf %2, %3 : vector<16x1xf32>
    %5 = vector.broadcast %4 : vector<16x1xf32> to vector<16x32xf32>
    %6 = arith.subf %0, %5 : vector<16x32xf32>
    %7 = arith.mulf %6, %6 : vector<16x32xf32>
    %cst_2 = arith.constant dense<0.000000e+00> : vector<16xf32>
    %8 = vector.multi_reduction <add>, %7, %cst_2 [1] : vector<16x32xf32> to vector<16xf32>
    %9 = vector.shape_cast %8 : vector<16xf32> to vector<16x1xf32>
    %cst_3 = arith.constant 3.200000e+01 : f32
    %10 = vector.broadcast %cst_3 : f32 to vector<16x1xf32>
    %11 = arith.divf %9, %10 : vector<16x1xf32>
    %12 = vector.broadcast %4 : vector<16x1xf32> to vector<16x32xf32>
    %13 = arith.subf %0, %12 : vector<16x32xf32>
    %cst_4 = arith.constant 9.99999996E-13 : f32
    %14 = vector.broadcast %cst_4 : f32 to vector<16x1xf32>
    %15 = arith.addf %11, %14 : vector<16x1xf32>
    %16 = math.rsqrt %15 : vector<16x1xf32>
    %17 = vector.broadcast %16 : vector<16x1xf32> to vector<16x32xf32>
    %18 = arith.mulf %13, %17 : vector<16x32xf32>
    %c0_5 = arith.constant 0 : index
    %c0_6 = arith.constant 0 : index
    %19 = vector.load %arg2[%c0_5, %c0_6] : memref<1x32xf32, #tpu.memory_space<vmem>>, vector<1x32xf32>
    %20 = vector.broadcast %19 : vector<1x32xf32> to vector<16x32xf32>
    %21 = arith.mulf %18, %20 : vector<16x32xf32>
    %c0_7 = arith.constant 0 : index
    %c0_8 = arith.constant 0 : index
    %22 = vector.load %arg3[%c0_7, %c0_8] : memref<1x32xf32, #tpu.memory_space<vmem>>, vector<1x32xf32>
    %23 = vector.broadcast %22 : vector<1x32xf32> to vector<16x32xf32>
    %24 = arith.addf %21, %23 : vector<16x32xf32>
    %25 = arith.truncf %24 : vector<16x32xf32> to vector<16x32xbf16>
    %c0_9 = arith.constant 0 : index
    %c0_10 = arith.constant 0 : index
    %26 = vector.load %arg4[%c0_9, %c0_10] : memref<16x32xbf16, #tpu.memory_space<vmem>>, vector<16x32xbf16>
    tpu.vector_store %arg4[%c0_9, %c0_10], %25 {strides = array<i32>} : memref<16x32xbf16, #tpu.memory_space<vmem>>, vector<16x32xbf16>,
    return
  }
  func.func @transform_0(%arg0: i32) -> (i32, i32) {
    %c0_i32 = arith.constant 0 : i32
    %c0_i32_0 = arith.constant 0 : i32
    return %arg0, %c0_i32 : i32, i32
  }
  func.func @transform_1(%arg0: i32) -> (i32, i32) {
    %c0_i32 = arith.constant 0 : i32
    %c0_i32_0 = arith.constant 0 : i32
    %c0_i32_1 = arith.constant 0 : i32
    return %c0_i32, %c0_i32_0 : i32, i32
  }
  func.func @transform_2(%arg0: i32) -> (i32, i32) {
    %c0_i32 = arith.constant 0 : i32
    %c0_i32_0 = arith.constant 0 : i32
    %c0_i32_1 = arith.constant 0 : i32
    return %c0_i32, %c0_i32_0 : i32, i32
  }
  func.func @transform_3(%arg0: i32) -> (i32, i32) {
    %c0_i32 = arith.constant 0 : i32
    %c0_i32_0 = arith.constant 0 : i32
    return %arg0, %c0_i32 : i32, i32
  }
}

module attributes {stable_mosaic.version = 11 : i64} {
  func.func @_linear_kernel(%arg0: i32, %arg1: i32, %arg2: i32, %arg3: memref<16x32xbf16, #tpu.memory_space<vmem>>, %arg4: memref<32x96xbf16, #tpu.memory_space<vmem>>, %arg5: memref<1x96xf32, #tpu.memory_space<vmem>>, %arg6: memref<16x96xbf16, #tpu.memory_space<vmem>>, %arg7: memref<16x96xf32, #tpu.memory_space<vmem>>) attributes {dimension_semantics = [#tpu.dimension_semantics<parallel>, #tpu.dimension_semantics<parallel>, #tpu.dimension_semantics<arbitrary>], iteration_bounds = array<i64: 1, 1, 1>, scalar_prefetch = 0 : i64, scratch_operands = 1 : i64, tpu.core_type = #tpu.core_type<tc>, window_params = [{transform_indices = @transform_0, window_bounds = array<i64: 16, 32>}, {transform_indices = @transform_1, window_bounds = array<i64: 32, 96>}, {transform_indices = @transform_2, window_bounds = array<i64: 1, 96>}, {transform_indices = @transform_3, window_bounds = array<i64: 16, 96>}]} {
    %c0_i32 = arith.constant 0 : i32
    %0 = arith.cmpi eq, %arg2, %c0_i32 : i32
    %1 = arith.extui %0 : i1 to i32
    %c0_i32_0 = arith.constant 0 : i32
    %2 = arith.cmpi ne, %1, %c0_i32_0 : i32
    scf.if %2 {
      %cst_10 = arith.constant 0.000000e+00 : f32
      %12 = vector.broadcast %cst_10 : f32 to vector<16x96xf32>
      %c0_11 = arith.constant 0 : index
      %c0_12 = arith.constant 0 : index
      %13 = vector.load %arg7[%c0_11, %c0_12] : memref<16x96xf32, #tpu.memory_space<vmem>>, vector<16x96xf32>
      tpu.vector_store %arg7[%c0_11, %c0_12], %12 {strides = array<i32>} : memref<16x96xf32, #tpu.memory_space<vmem>>, vector<16x96xf32>,
    } else {
    }
    %c0 = arith.constant 0 : index
    %c0_1 = arith.constant 0 : index
    %3 = vector.load %arg7[%c0, %c0_1] : memref<16x96xf32, #tpu.memory_space<vmem>>, vector<16x96xf32>
    %c0_2 = arith.constant 0 : index
    %c0_3 = arith.constant 0 : index
    %4 = vector.load %arg3[%c0_2, %c0_3] : memref<16x32xbf16, #tpu.memory_space<vmem>>, vector<16x32xbf16>
    %c0_4 = arith.constant 0 : index
    %c0_5 = arith.constant 0 : index
    %5 = vector.load %arg4[%c0_4, %c0_5] : memref<32x96xbf16, #tpu.memory_space<vmem>>, vector<32x96xbf16>
    %cst = arith.constant dense<0.000000e+00> : vector<16x96xf32>
    %6 = tpu.matmul %4, %5, %cst {dimension_numbers = #tpu.dot_dimension_numbers<[1], [0], [0], [1], [0, 0, 1, 1], [], []>} : vector<16x32xbf16>, vector<32x96xbf16>, vector<16x96xf32> -> vector<16x96xf32>
    %7 = arith.addf %3, %6 : vector<16x96xf32>
    %c0_6 = arith.constant 0 : index
    %c0_7 = arith.constant 0 : index
    %8 = vector.load %arg7[%c0_6, %c0_7] : memref<16x96xf32, #tpu.memory_space<vmem>>, vector<16x96xf32>
    tpu.vector_store %arg7[%c0_6, %c0_7], %7 {strides = array<i32>} : memref<16x96xf32, #tpu.memory_space<vmem>>, vector<16x96xf32>,
    %c0_i32_8 = arith.constant 0 : i32
    %9 = arith.cmpi eq, %arg2, %c0_i32_8 : i32
    %10 = arith.extui %9 : i1 to i32
    %c0_i32_9 = arith.constant 0 : i32
    %11 = arith.cmpi ne, %10, %c0_i32_9 : i32
    scf.if %11 {
      %c0_10 = arith.constant 0 : index
      %c0_11 = arith.constant 0 : index
      %12 = vector.load %arg7[%c0_10, %c0_11] : memref<16x96xf32, #tpu.memory_space<vmem>>, vector<16x96xf32>
      %c0_12 = arith.constant 0 : index
      %c0_13 = arith.constant 0 : index
      %13 = vector.load %arg5[%c0_12, %c0_13] : memref<1x96xf32, #tpu.memory_space<vmem>>, vector<1x96xf32>
      %14 = vector.broadcast %13 : vector<1x96xf32> to vector<16x96xf32>
      %15 = arith.addf %12, %14 : vector<16x96xf32>
      %16 = arith.truncf %15 : vector<16x96xf32> to vector<16x96xbf16>
      %c0_14 = arith.constant 0 : index
      %c0_15 = arith.constant 0 : index
      %17 = vector.load %arg6[%c0_14, %c0_15] : memref<16x96xbf16, #tpu.memory_space<vmem>>, vector<16x96xbf16>
      tpu.vector_store %arg6[%c0_14, %c0_15], %16 {strides = array<i32>} : memref<16x96xbf16, #tpu.memory_space<vmem>>, vector<16x96xbf16>,
    } else {
    }
    return
  }
  func.func @transform_0(%arg0: i32, %arg1: i32, %arg2: i32) -> (i32, i32) {
    %c0_i32 = arith.constant 0 : i32
    return %arg0, %arg2 : i32, i32
  }
  func.func @transform_1(%arg0: i32, %arg1: i32, %arg2: i32) -> (i32, i32) {
    %c0_i32 = arith.constant 0 : i32
    return %arg2, %arg1 : i32, i32
  }
  func.func @transform_2(%arg0: i32, %arg1: i32, %arg2: i32) -> (i32, i32) {
    %c0_i32 = arith.constant 0 : i32
    %c0_i32_0 = arith.constant 0 : i32
    return %c0_i32, %arg1 : i32, i32
  }
  func.func @transform_3(%arg0: i32, %arg1: i32, %arg2: i32) -> (i32, i32) {
    %c0_i32 = arith.constant 0 : i32
    return %arg0, %arg1 : i32, i32
  }
}

module attributes {stable_mosaic.version = 11 : i64} {
  func.func @_linear_res_ln_kernel(%arg0: i32, %arg1: memref<16x32xbf16, #tpu.memory_space<vmem>>, %arg2: memref<32x32xbf16, #tpu.memory_space<vmem>>, %arg3: memref<1x32xf32, #tpu.memory_space<vmem>>, %arg4: memref<16x32xbf16, #tpu.memory_space<vmem>>, %arg5: memref<1x32xf32, #tpu.memory_space<vmem>>, %arg6: memref<1x32xf32, #tpu.memory_space<vmem>>, %arg7: memref<16x32xbf16, #tpu.memory_space<vmem>>) attributes {dimension_semantics = [#tpu.dimension_semantics<parallel>], iteration_bounds = array<i64: 1>, scalar_prefetch = 0 : i64, scratch_operands = 0 : i64, tpu.core_type = #tpu.core_type<tc>, window_params = [{transform_indices = @transform_0, window_bounds = array<i64: 16, 32>}, {pipeline_mode = #tpu.pipeline_mode<synchronous>, transform_indices = @transform_1, window_bounds = array<i64: 32, 32>}, {pipeline_mode = #tpu.pipeline_mode<synchronous>, transform_indices = @transform_2, window_bounds = array<i64: 1, 32>}, {transform_indices = @transform_3, window_bounds = array<i64: 16, 32>}, {pipeline_mode = #tpu.pipeline_mode<synchronous>, transform_indices = @transform_4, window_bounds = array<i64: 1, 32>}, {pipeline_mode = #tpu.pipeline_mode<synchronous>, transform_indices = @transform_5, window_bounds = array<i64: 1, 32>}, {transform_indices = @transform_6, window_bounds = array<i64: 16, 32>}]} {
    %c0 = arith.constant 0 : index
    %c0_0 = arith.constant 0 : index
    %0 = vector.load %arg1[%c0, %c0_0] : memref<16x32xbf16, #tpu.memory_space<vmem>>, vector<16x32xbf16>
    %c0_1 = arith.constant 0 : index
    %c0_2 = arith.constant 0 : index
    %1 = vector.load %arg2[%c0_1, %c0_2] : memref<32x32xbf16, #tpu.memory_space<vmem>>, vector<32x32xbf16>
    %cst = arith.constant dense<0.000000e+00> : vector<16x32xf32>
    %2 = tpu.matmul %0, %1, %cst {dimension_numbers = #tpu.dot_dimension_numbers<[1], [0], [0], [1], [0, 0, 1, 1], [], []>} : vector<16x32xbf16>, vector<32x32xbf16>, vector<16x32xf32> -> vector<16x32xf32>
    %c0_3 = arith.constant 0 : index
    %c0_4 = arith.constant 0 : index
    %3 = vector.load %arg3[%c0_3, %c0_4] : memref<1x32xf32, #tpu.memory_space<vmem>>, vector<1x32xf32>
    %4 = vector.broadcast %3 : vector<1x32xf32> to vector<16x32xf32>
    %5 = arith.addf %2, %4 : vector<16x32xf32>
    %c0_5 = arith.constant 0 : index
    %c0_6 = arith.constant 0 : index
    %6 = vector.load %arg4[%c0_5, %c0_6] : memref<16x32xbf16, #tpu.memory_space<vmem>>, vector<16x32xbf16>
    %7 = arith.extf %6 : vector<16x32xbf16> to vector<16x32xf32>
    %8 = arith.addf %5, %7 : vector<16x32xf32>
    %cst_7 = arith.constant dense<0.000000e+00> : vector<16xf32>
    %9 = vector.multi_reduction <add>, %8, %cst_7 [1] : vector<16x32xf32> to vector<16xf32>
    %10 = vector.shape_cast %9 : vector<16xf32> to vector<16x1xf32>
    %cst_8 = arith.constant 3.200000e+01 : f32
    %11 = vector.broadcast %cst_8 : f32 to vector<16x1xf32>
    %12 = arith.divf %10, %11 : vector<16x1xf32>
    %13 = vector.broadcast %12 : vector<16x1xf32> to vector<16x32xf32>
    %14 = arith.subf %8, %13 : vector<16x32xf32>
    %15 = arith.mulf %14, %14 : vector<16x32xf32>
    %cst_9 = arith.constant dense<0.000000e+00> : vector<16xf32>
    %16 = vector.multi_reduction <add>, %15, %cst_9 [1] : vector<16x32xf32> to vector<16xf32>
    %17 = vector.shape_cast %16 : vector<16xf32> to vector<16x1xf32>
    %cst_10 = arith.constant 3.200000e+01 : f32
    %18 = vector.broadcast %cst_10 : f32 to vector<16x1xf32>
    %19 = arith.divf %17, %18 : vector<16x1xf32>
    %20 = vector.broadcast %12 : vector<16x1xf32> to vector<16x32xf32>
    %21 = arith.subf %8, %20 : vector<16x32xf32>
    %cst_11 = arith.constant 9.99999996E-13 : f32
    %22 = vector.broadcast %cst_11 : f32 to vector<16x1xf32>
    %23 = arith.addf %19, %22 : vector<16x1xf32>
    %24 = math.rsqrt %23 : vector<16x1xf32>
    %25 = vector.broadcast %24 : vector<16x1xf32> to vector<16x32xf32>
    %26 = arith.mulf %21, %25 : vector<16x32xf32>
    %c0_12 = arith.constant 0 : index
    %c0_13 = arith.constant 0 : index
    %27 = vector.load %arg5[%c0_12, %c0_13] : memref<1x32xf32, #tpu.memory_space<vmem>>, vector<1x32xf32>
    %28 = vector.broadcast %27 : vector<1x32xf32> to vector<16x32xf32>
    %29 = arith.mulf %26, %28 : vector<16x32xf32>
    %c0_14 = arith.constant 0 : index
    %c0_15 = arith.constant 0 : index
    %30 = vector.load %arg6[%c0_14, %c0_15] : memref<1x32xf32, #tpu.memory_space<vmem>>, vector<1x32xf32>
    %31 = vector.broadcast %30 : vector<1x32xf32> to vector<16x32xf32>
    %32 = arith.addf %29, %31 : vector<16x32xf32>
    %33 = arith.truncf %32 : vector<16x32xf32> to vector<16x32xbf16>
    %c0_16 = arith.constant 0 : index
    %c0_17 = arith.constant 0 : index
    %34 = vector.load %arg7[%c0_16, %c0_17] : memref<16x32xbf16, #tpu.memory_space<vmem>>, vector<16x32xbf16>
    tpu.vector_store %arg7[%c0_16, %c0_17], %33 {strides = array<i32>} : memref<16x32xbf16, #tpu.memory_space<vmem>>, vector<16x32xbf16>,
    return
  }
  func.func @transform_0(%arg0: i32) -> (i32, i32) {
    %c0_i32 = arith.constant 0 : i32
    %c0_i32_0 = arith.constant 0 : i32
    return %arg0, %c0_i32 : i32, i32
  }
  func.func @transform_1(%arg0: i32) -> (i32, i32) {
    %c0_i32 = arith.constant 0 : i32
    %c0_i32_0 = arith.constant 0 : i32
    %c0_i32_1 = arith.constant 0 : i32
    return %c0_i32, %c0_i32_0 : i32, i32
  }
  func.func @transform_2(%arg0: i32) -> (i32, i32) {
    %c0_i32 = arith.constant 0 : i32
    %c0_i32_0 = arith.constant 0 : i32
    %c0_i32_1 = arith.constant 0 : i32
    return %c0_i32, %c0_i32_0 : i32, i32
  }
  func.func @transform_3(%arg0: i32) -> (i32, i32) {
    %c0_i32 = arith.constant 0 : i32
    %c0_i32_0 = arith.constant 0 : i32
    return %arg0, %c0_i32 : i32, i32
  }
  func.func @transform_4(%arg0: i32) -> (i32, i32) {
    %c0_i32 = arith.constant 0 : i32
    %c0_i32_0 = arith.constant 0 : i32
    %c0_i32_1 = arith.constant 0 : i32
    return %c0_i32, %c0_i32_0 : i32, i32
  }
  func.func @transform_5(%arg0: i32) -> (i32, i32) {
    %c0_i32 = arith.constant 0 : i32
    %c0_i32_0 = arith.constant 0 : i32
    %c0_i32_1 = arith.constant 0 : i32
    return %c0_i32, %c0_i32_0 : i32, i32
  }
  func.func @transform_6(%arg0: i32) -> (i32, i32) {
    %c0_i32 = arith.constant 0 : i32
    %c0_i32_0 = arith.constant 0 : i32
    return %arg0, %c0_i32 : i32, i32
  }
}

module attributes {stable_mosaic.version = 11 : i64} {
  func.func @_attn_kernel(%arg0: i32, %arg1: memref<1x8x96xbf16, #tpu.memory_space<vmem>>, %arg2: memref<1x1x8xf32, #tpu.memory_space<vmem>>, %arg3: memref<1x8x32xbf16, #tpu.memory_space<vmem>>) attributes {dimension_semantics = [#tpu.dimension_semantics<parallel>], iteration_bounds = array<i64: 2>, scalar_prefetch = 0 : i64, scratch_operands = 0 : i64, tpu.core_type = #tpu.core_type<tc>, window_params = [{transform_indices = @transform_0, window_bounds = array<i64: 1, 8, 96>}, {transform_indices = @transform_1, window_bounds = array<i64: 1, 1, 8>}, {transform_indices = @transform_2, window_bounds = array<i64: 1, 8, 32>}]} {
    %c0 = arith.constant 0 : index
    %c0_0 = arith.constant 0 : index
    %c0_1 = arith.constant 0 : index
    %0 = vector.load %arg2[%c0, %c0_0, %c0_1] : memref<1x1x8xf32, #tpu.memory_space<vmem>>, vector<1x1x8xf32>
    %1 = vector.shape_cast %0 : vector<1x1x8xf32> to vector<1x8xf32>
    %c0_2 = arith.constant 0 : index
    %c0_3 = arith.constant 0 : index
    %c0_4 = arith.constant 0 : index
    %2 = vector.load %arg1[%c0_2, %c0_3, %c0_4] : memref<1x8x96xbf16, #tpu.memory_space<vmem>>, vector<1x8x8xbf16>
    %3 = vector.shape_cast %2 : vector<1x8x8xbf16> to vector<8x8xbf16>
    %c0_5 = arith.constant 0 : index
    %c0_6 = arith.constant 0 : index
    %c32 = arith.constant 32 : index
    %4 = vector.load %arg1[%c0_5, %c0_6, %c32] : memref<1x8x96xbf16, #tpu.memory_space<vmem>>, vector<1x8x8xbf16>
    %5 = vector.shape_cast %4 : vector<1x8x8xbf16> to vector<8x8xbf16>
    %c0_7 = arith.constant 0 : index
    %c0_8 = arith.constant 0 : index
    %c64 = arith.constant 64 : index
    %6 = vector.load %arg1[%c0_7, %c0_8, %c64] : memref<1x8x96xbf16, #tpu.memory_space<vmem>>, vector<1x8x8xbf16>
    %7 = vector.shape_cast %6 : vector<1x8x8xbf16> to vector<8x8xbf16>
    %cst = arith.constant dense<0.000000e+00> : vector<8x8xf32>
    %8 = tpu.matmul %3, %5, %cst {dimension_numbers = #tpu.dot_dimension_numbers<[1], [1], [0], [0], [0, 0, 1, 0], [], []>} : vector<8x8xbf16>, vector<8x8xbf16>, vector<8x8xf32> -> vector<8x8xf32>
    %9 = vector.broadcast %1 : vector<1x8xf32> to vector<8x8xf32>
    %10 = arith.addf %8, %9 : vector<8x8xf32>
    %cst_9 = arith.constant dense<0xFF800000> : vector<8xf32>
    %11 = vector.multi_reduction <maximumf>, %10, %cst_9 [1] : vector<8x8xf32> to vector<8xf32>
    %12 = vector.shape_cast %11 : vector<8xf32> to vector<8x1xf32>
    %13 = vector.broadcast %12 : vector<8x1xf32> to vector<8x8xf32>
    %14 = arith.subf %10, %13 : vector<8x8xf32>
    %15 = math.exp %14 : vector<8x8xf32>
    %cst_10 = arith.constant dense<0.000000e+00> : vector<8xf32>
    %16 = vector.multi_reduction <add>, %15, %cst_10 [1] : vector<8x8xf32> to vector<8xf32>
    %17 = vector.shape_cast %16 : vector<8xf32> to vector<8x1xf32>
    %18 = tpu.reciprocal %17 {approx = true} : vector<8x1xf32> -> vector<8x1xf32>
    %19 = vector.broadcast %18 : vector<8x1xf32> to vector<8x8xf32>
    %20 = arith.mulf %15, %19 : vector<8x8xf32>
    %21 = arith.truncf %20 : vector<8x8xf32> to vector<8x8xbf16>
    %cst_11 = arith.constant dense<0.000000e+00> : vector<8x8xf32>
    %22 = tpu.matmul %21, %7, %cst_11 {dimension_numbers = #tpu.dot_dimension_numbers<[1], [0], [0], [1], [0, 0, 1, 1], [], []>} : vector<8x8xbf16>, vector<8x8xbf16>, vector<8x8xf32> -> vector<8x8xf32>
    %23 = arith.truncf %22 : vector<8x8xf32> to vector<8x8xbf16>
    %c0_12 = arith.constant 0 : index
    %c0_13 = arith.constant 0 : index
    %c0_14 = arith.constant 0 : index
    %24 = vector.load %arg3[%c0_12, %c0_13, %c0_14] : memref<1x8x32xbf16, #tpu.memory_space<vmem>>, vector<1x8x8xbf16>
    %25 = vector.shape_cast %24 : vector<1x8x8xbf16> to vector<8x8xbf16>
    %26 = vector.shape_cast %23 : vector<8x8xbf16> to vector<1x8x8xbf16>
    tpu.vector_store %arg3[%c0_12, %c0_13, %c0_14], %26 {strides = array<i32>} : memref<1x8x32xbf16, #tpu.memory_space<vmem>>, vector<1x8x8xbf16>,
    %c0_15 = arith.constant 0 : index
    %c0_16 = arith.constant 0 : index
    %c8 = arith.constant 8 : index
    %27 = vector.load %arg1[%c0_15, %c0_16, %c8] : memref<1x8x96xbf16, #tpu.memory_space<vmem>>, vector<1x8x8xbf16>
    %28 = vector.shape_cast %27 : vector<1x8x8xbf16> to vector<8x8xbf16>
    %c0_17 = arith.constant 0 : index
    %c0_18 = arith.constant 0 : index
    %c40 = arith.constant 40 : index
    %29 = vector.load %arg1[%c0_17, %c0_18, %c40] : memref<1x8x96xbf16, #tpu.memory_space<vmem>>, vector<1x8x8xbf16>
    %30 = vector.shape_cast %29 : vector<1x8x8xbf16> to vector<8x8xbf16>
    %c0_19 = arith.constant 0 : index
    %c0_20 = arith.constant 0 : index
    %c72 = arith.constant 72 : index
    %31 = vector.load %arg1[%c0_19, %c0_20, %c72] : memref<1x8x96xbf16, #tpu.memory_space<vmem>>, vector<1x8x8xbf16>
    %32 = vector.shape_cast %31 : vector<1x8x8xbf16> to vector<8x8xbf16>
    %cst_21 = arith.constant dense<0.000000e+00> : vector<8x8xf32>
    %33 = tpu.matmul %28, %30, %cst_21 {dimension_numbers = #tpu.dot_dimension_numbers<[1], [1], [0], [0], [0, 0, 1, 0], [], []>} : vector<8x8xbf16>, vector<8x8xbf16>, vector<8x8xf32> -> vector<8x8xf32>
    %34 = vector.broadcast %1 : vector<1x8xf32> to vector<8x8xf32>
    %35 = arith.addf %33, %34 : vector<8x8xf32>
    %cst_22 = arith.constant dense<0xFF800000> : vector<8xf32>
    %36 = vector.multi_reduction <maximumf>, %35, %cst_22 [1] : vector<8x8xf32> to vector<8xf32>
    %37 = vector.shape_cast %36 : vector<8xf32> to vector<8x1xf32>
    %38 = vector.broadcast %37 : vector<8x1xf32> to vector<8x8xf32>
    %39 = arith.subf %35, %38 : vector<8x8xf32>
    %40 = math.exp %39 : vector<8x8xf32>
    %cst_23 = arith.constant dense<0.000000e+00> : vector<8xf32>
    %41 = vector.multi_reduction <add>, %40, %cst_23 [1] : vector<8x8xf32> to vector<8xf32>
    %42 = vector.shape_cast %41 : vector<8xf32> to vector<8x1xf32>
    %43 = tpu.reciprocal %42 {approx = true} : vector<8x1xf32> -> vector<8x1xf32>
    %44 = vector.broadcast %43 : vector<8x1xf32> to vector<8x8xf32>
    %45 = arith.mulf %40, %44 : vector<8x8xf32>
    %46 = arith.truncf %45 : vector<8x8xf32> to vector<8x8xbf16>
    %cst_24 = arith.constant dense<0.000000e+00> : vector<8x8xf32>
    %47 = tpu.matmul %46, %32, %cst_24 {dimension_numbers = #tpu.dot_dimension_numbers<[1], [0], [0], [1], [0, 0, 1, 1], [], []>} : vector<8x8xbf16>, vector<8x8xbf16>, vector<8x8xf32> -> vector<8x8xf32>
    %48 = arith.truncf %47 : vector<8x8xf32> to vector<8x8xbf16>
    %c0_25 = arith.constant 0 : index
    %c0_26 = arith.constant 0 : index
    %c8_27 = arith.constant 8 : index
    %49 = vector.load %arg3[%c0_25, %c0_26, %c8_27] : memref<1x8x32xbf16, #tpu.memory_space<vmem>>, vector<1x8x8xbf16>
    %50 = vector.shape_cast %49 : vector<1x8x8xbf16> to vector<8x8xbf16>
    %51 = vector.shape_cast %48 : vector<8x8xbf16> to vector<1x8x8xbf16>
    tpu.vector_store %arg3[%c0_25, %c0_26, %c8_27], %51 {strides = array<i32>} : memref<1x8x32xbf16, #tpu.memory_space<vmem>>, vector<1x8x8xbf16>,
    %c0_28 = arith.constant 0 : index
    %c0_29 = arith.constant 0 : index
    %c16 = arith.constant 16 : index
    %52 = vector.load %arg1[%c0_28, %c0_29, %c16] : memref<1x8x96xbf16, #tpu.memory_space<vmem>>, vector<1x8x8xbf16>
    %53 = vector.shape_cast %52 : vector<1x8x8xbf16> to vector<8x8xbf16>
    %c0_30 = arith.constant 0 : index
    %c0_31 = arith.constant 0 : index
    %c48 = arith.constant 48 : index
    %54 = vector.load %arg1[%c0_30, %c0_31, %c48] : memref<1x8x96xbf16, #tpu.memory_space<vmem>>, vector<1x8x8xbf16>
    %55 = vector.shape_cast %54 : vector<1x8x8xbf16> to vector<8x8xbf16>
    %c0_32 = arith.constant 0 : index
    %c0_33 = arith.constant 0 : index
    %c80 = arith.constant 80 : index
    %56 = vector.load %arg1[%c0_32, %c0_33, %c80] : memref<1x8x96xbf16, #tpu.memory_space<vmem>>, vector<1x8x8xbf16>
    %57 = vector.shape_cast %56 : vector<1x8x8xbf16> to vector<8x8xbf16>
    %cst_34 = arith.constant dense<0.000000e+00> : vector<8x8xf32>
    %58 = tpu.matmul %53, %55, %cst_34 {dimension_numbers = #tpu.dot_dimension_numbers<[1], [1], [0], [0], [0, 0, 1, 0], [], []>} : vector<8x8xbf16>, vector<8x8xbf16>, vector<8x8xf32> -> vector<8x8xf32>
    %59 = vector.broadcast %1 : vector<1x8xf32> to vector<8x8xf32>
    %60 = arith.addf %58, %59 : vector<8x8xf32>
    %cst_35 = arith.constant dense<0xFF800000> : vector<8xf32>
    %61 = vector.multi_reduction <maximumf>, %60, %cst_35 [1] : vector<8x8xf32> to vector<8xf32>
    %62 = vector.shape_cast %61 : vector<8xf32> to vector<8x1xf32>
    %63 = vector.broadcast %62 : vector<8x1xf32> to vector<8x8xf32>
    %64 = arith.subf %60, %63 : vector<8x8xf32>
    %65 = math.exp %64 : vector<8x8xf32>
    %cst_36 = arith.constant dense<0.000000e+00> : vector<8xf32>
    %66 = vector.multi_reduction <add>, %65, %cst_36 [1] : vector<8x8xf32> to vector<8xf32>
    %67 = vector.shape_cast %66 : vector<8xf32> to vector<8x1xf32>
    %68 = tpu.reciprocal %67 {approx = true} : vector<8x1xf32> -> vector<8x1xf32>
    %69 = vector.broadcast %68 : vector<8x1xf32> to vector<8x8xf32>
    %70 = arith.mulf %65, %69 : vector<8x8xf32>
    %71 = arith.truncf %70 : vector<8x8xf32> to vector<8x8xbf16>
    %cst_37 = arith.constant dense<0.000000e+00> : vector<8x8xf32>
    %72 = tpu.matmul %71, %57, %cst_37 {dimension_numbers = #tpu.dot_dimension_numbers<[1], [0], [0], [1], [0, 0, 1, 1], [], []>} : vector<8x8xbf16>, vector<8x8xbf16>, vector<8x8xf32> -> vector<8x8xf32>
    %73 = arith.truncf %72 : vector<8x8xf32> to vector<8x8xbf16>
    %c0_38 = arith.constant 0 : index
    %c0_39 = arith.constant 0 : index
    %c16_40 = arith.constant 16 : index
    %74 = vector.load %arg3[%c0_38, %c0_39, %c16_40] : memref<1x8x32xbf16, #tpu.memory_space<vmem>>, vector<1x8x8xbf16>
    %75 = vector.shape_cast %74 : vector<1x8x8xbf16> to vector<8x8xbf16>
    %76 = vector.shape_cast %73 : vector<8x8xbf16> to vector<1x8x8xbf16>
    tpu.vector_store %arg3[%c0_38, %c0_39, %c16_40], %76 {strides = array<i32>} : memref<1x8x32xbf16, #tpu.memory_space<vmem>>, vector<1x8x8xbf16>,
    %c0_41 = arith.constant 0 : index
    %c0_42 = arith.constant 0 : index
    %c24 = arith.constant 24 : index
    %77 = vector.load %arg1[%c0_41, %c0_42, %c24] : memref<1x8x96xbf16, #tpu.memory_space<vmem>>, vector<1x8x8xbf16>
    %78 = vector.shape_cast %77 : vector<1x8x8xbf16> to vector<8x8xbf16>
    %c0_43 = arith.constant 0 : index
    %c0_44 = arith.constant 0 : index
    %c56 = arith.constant 56 : index
    %79 = vector.load %arg1[%c0_43, %c0_44, %c56] : memref<1x8x96xbf16, #tpu.memory_space<vmem>>, vector<1x8x8xbf16>
    %80 = vector.shape_cast %79 : vector<1x8x8xbf16> to vector<8x8xbf16>
    %c0_45 = arith.constant 0 : index
    %c0_46 = arith.constant 0 : index
    %c88 = arith.constant 88 : index
    %81 = vector.load %arg1[%c0_45, %c0_46, %c88] : memref<1x8x96xbf16, #tpu.memory_space<vmem>>, vector<1x8x8xbf16>
    %82 = vector.shape_cast %81 : vector<1x8x8xbf16> to vector<8x8xbf16>
    %cst_47 = arith.constant dense<0.000000e+00> : vector<8x8xf32>
    %83 = tpu.matmul %78, %80, %cst_47 {dimension_numbers = #tpu.dot_dimension_numbers<[1], [1], [0], [0], [0, 0, 1, 0], [], []>} : vector<8x8xbf16>, vector<8x8xbf16>, vector<8x8xf32> -> vector<8x8xf32>
    %84 = vector.broadcast %1 : vector<1x8xf32> to vector<8x8xf32>
    %85 = arith.addf %83, %84 : vector<8x8xf32>
    %cst_48 = arith.constant dense<0xFF800000> : vector<8xf32>
    %86 = vector.multi_reduction <maximumf>, %85, %cst_48 [1] : vector<8x8xf32> to vector<8xf32>
    %87 = vector.shape_cast %86 : vector<8xf32> to vector<8x1xf32>
    %88 = vector.broadcast %87 : vector<8x1xf32> to vector<8x8xf32>
    %89 = arith.subf %85, %88 : vector<8x8xf32>
    %90 = math.exp %89 : vector<8x8xf32>
    %cst_49 = arith.constant dense<0.000000e+00> : vector<8xf32>
    %91 = vector.multi_reduction <add>, %90, %cst_49 [1] : vector<8x8xf32> to vector<8xf32>
    %92 = vector.shape_cast %91 : vector<8xf32> to vector<8x1xf32>
    %93 = tpu.reciprocal %92 {approx = true} : vector<8x1xf32> -> vector<8x1xf32>
    %94 = vector.broadcast %93 : vector<8x1xf32> to vector<8x8xf32>
    %95 = arith.mulf %90, %94 : vector<8x8xf32>
    %96 = arith.truncf %95 : vector<8x8xf32> to vector<8x8xbf16>
    %cst_50 = arith.constant dense<0.000000e+00> : vector<8x8xf32>
    %97 = tpu.matmul %96, %82, %cst_50 {dimension_numbers = #tpu.dot_dimension_numbers<[1], [0], [0], [1], [0, 0, 1, 1], [], []>} : vector<8x8xbf16>, vector<8x8xbf16>, vector<8x8xf32> -> vector<8x8xf32>
    %98 = arith.truncf %97 : vector<8x8xf32> to vector<8x8xbf16>
    %c0_51 = arith.constant 0 : index
    %c0_52 = arith.constant 0 : index
    %c24_53 = arith.constant 24 : index
    %99 = vector.load %arg3[%c0_51, %c0_52, %c24_53] : memref<1x8x32xbf16, #tpu.memory_space<vmem>>, vector<1x8x8xbf16>
    %100 = vector.shape_cast %99 : vector<1x8x8xbf16> to vector<8x8xbf16>
    %101 = vector.shape_cast %98 : vector<8x8xbf16> to vector<1x8x8xbf16>
    tpu.vector_store %arg3[%c0_51, %c0_52, %c24_53], %101 {strides = array<i32>} : memref<1x8x32xbf16, #tpu.memory_space<vmem>>, vector<1x8x8xbf16>,
    return
  }
  func.func @transform_0(%arg0: i32) -> (i32, i32, i32) {
    %c0_i32 = arith.constant 0 : i32
    %c0_i32_0 = arith.constant 0 : i32
    %c0_i32_1 = arith.constant 0 : i32
    return %arg0, %c0_i32, %c0_i32_0 : i32, i32, i32
  }
  func.func @transform_1(%arg0: i32) -> (i32, i32, i32) {
    %c0_i32 = arith.constant 0 : i32
    %c0_i32_0 = arith.constant 0 : i32
    %c0_i32_1 = arith.constant 0 : i32
    return %arg0, %c0_i32, %c0_i32_0 : i32, i32, i32
  }
  func.func @transform_2(%arg0: i32) -> (i32, i32, i32) {
    %c0_i32 = arith.constant 0 : i32
    %c0_i32_0 = arith.constant 0 : i32
    %c0_i32_1 = arith.constant 0 : i32
    return %arg0, %c0_i32, %c0_i32_0 : i32, i32, i32
  }
}

module attributes {stable_mosaic.version = 11 : i64} {
  func.func @_linear_kernel(%arg0: i32, %arg1: i32, %arg2: i32, %arg3: memref<16x64xbf16, #tpu.memory_space<vmem>>, %arg4: memref<64x32xbf16, #tpu.memory_space<vmem>>, %arg5: memref<1x32xf32, #tpu.memory_space<vmem>>, %arg6: memref<16x32xbf16, #tpu.memory_space<vmem>>, %arg7: memref<16x32xf32, #tpu.memory_space<vmem>>) attributes {dimension_semantics = [#tpu.dimension_semantics<parallel>, #tpu.dimension_semantics<parallel>, #tpu.dimension_semantics<arbitrary>], iteration_bounds = array<i64: 1, 1, 1>, scalar_prefetch = 0 : i64, scratch_operands = 1 : i64, tpu.core_type = #tpu.core_type<tc>, window_params = [{transform_indices = @transform_0, window_bounds = array<i64: 16, 64>}, {transform_indices = @transform_1, window_bounds = array<i64: 64, 32>}, {transform_indices = @transform_2, window_bounds = array<i64: 1, 32>}, {transform_indices = @transform_3, window_bounds = array<i64: 16, 32>}]} {
    %c0_i32 = arith.constant 0 : i32
    %0 = arith.cmpi eq, %arg2, %c0_i32 : i32
    %1 = arith.extui %0 : i1 to i32
    %c0_i32_0 = arith.constant 0 : i32
    %2 = arith.cmpi ne, %1, %c0_i32_0 : i32
    scf.if %2 {
      %cst_10 = arith.constant 0.000000e+00 : f32
      %12 = vector.broadcast %cst_10 : f32 to vector<16x32xf32>
      %c0_11 = arith.constant 0 : index
      %c0_12 = arith.constant 0 : index
      %13 = vector.load %arg7[%c0_11, %c0_12] : memref<16x32xf32, #tpu.memory_space<vmem>>, vector<16x32xf32>
      tpu.vector_store %arg7[%c0_11, %c0_12], %12 {strides = array<i32>} : memref<16x32xf32, #tpu.memory_space<vmem>>, vector<16x32xf32>,
    } else {
    }
    %c0 = arith.constant 0 : index
    %c0_1 = arith.constant 0 : index
    %3 = vector.load %arg7[%c0, %c0_1] : memref<16x32xf32, #tpu.memory_space<vmem>>, vector<16x32xf32>
    %c0_2 = arith.constant 0 : index
    %c0_3 = arith.constant 0 : index
    %4 = vector.load %arg3[%c0_2, %c0_3] : memref<16x64xbf16, #tpu.memory_space<vmem>>, vector<16x64xbf16>
    %c0_4 = arith.constant 0 : index
    %c0_5 = arith.constant 0 : index
    %5 = vector.load %arg4[%c0_4, %c0_5] : memref<64x32xbf16, #tpu.memory_space<vmem>>, vector<64x32xbf16>
    %cst = arith.constant dense<0.000000e+00> : vector<16x32xf32>
    %6 = tpu.matmul %4, %5, %cst {dimension_numbers = #tpu.dot_dimension_numbers<[1], [0], [0], [1], [0, 0, 1, 1], [], []>} : vector<16x64xbf16>, vector<64x32xbf16>, vector<16x32xf32> -> vector<16x32xf32>
    %7 = arith.addf %3, %6 : vector<16x32xf32>
    %c0_6 = arith.constant 0 : index
    %c0_7 = arith.constant 0 : index
    %8 = vector.load %arg7[%c0_6, %c0_7] : memref<16x32xf32, #tpu.memory_space<vmem>>, vector<16x32xf32>
    tpu.vector_store %arg7[%c0_6, %c0_7], %7 {strides = array<i32>} : memref<16x32xf32, #tpu.memory_space<vmem>>, vector<16x32xf32>,
    %c0_i32_8 = arith.constant 0 : i32
    %9 = arith.cmpi eq, %arg2, %c0_i32_8 : i32
    %10 = arith.extui %9 : i1 to i32
    %c0_i32_9 = arith.constant 0 : i32
    %11 = arith.cmpi ne, %10, %c0_i32_9 : i32
    scf.if %11 {
      %c0_10 = arith.constant 0 : index
      %c0_11 = arith.constant 0 : index
      %12 = vector.load %arg7[%c0_10, %c0_11] : memref<16x32xf32, #tpu.memory_space<vmem>>, vector<16x32xf32>
      %c0_12 = arith.constant 0 : index
      %c0_13 = arith.constant 0 : index
      %13 = vector.load %arg5[%c0_12, %c0_13] : memref<1x32xf32, #tpu.memory_space<vmem>>, vector<1x32xf32>
      %14 = vector.broadcast %13 : vector<1x32xf32> to vector<16x32xf32>
      %15 = arith.addf %12, %14 : vector<16x32xf32>
      %16 = arith.truncf %15 : vector<16x32xf32> to vector<16x32xbf16>
      %c0_14 = arith.constant 0 : index
      %c0_15 = arith.constant 0 : index
      %17 = vector.load %arg6[%c0_14, %c0_15] : memref<16x32xbf16, #tpu.memory_space<vmem>>, vector<16x32xbf16>
      tpu.vector_store %arg6[%c0_14, %c0_15], %16 {strides = array<i32>} : memref<16x32xbf16, #tpu.memory_space<vmem>>, vector<16x32xbf16>,
    } else {
    }
    return
  }
  func.func @transform_0(%arg0: i32, %arg1: i32, %arg2: i32) -> (i32, i32) {
    %c0_i32 = arith.constant 0 : i32
    return %arg0, %arg2 : i32, i32
  }
  func.func @transform_1(%arg0: i32, %arg1: i32, %arg2: i32) -> (i32, i32) {
    %c0_i32 = arith.constant 0 : i32
    return %arg2, %arg1 : i32, i32
  }
  func.func @transform_2(%arg0: i32, %arg1: i32, %arg2: i32) -> (i32, i32) {
    %c0_i32 = arith.constant 0 : i32
    %c0_i32_0 = arith.constant 0 : i32
    return %c0_i32, %arg1 : i32, i32
  }
  func.func @transform_3(%arg0: i32, %arg1: i32, %arg2: i32) -> (i32, i32) {
    %c0_i32 = arith.constant 0 : i32
    return %arg0, %arg1 : i32, i32
  }
}

module attributes {stable_mosaic.version = 11 : i64} {
  func.func @_linear_kernel(%arg0: i32, %arg1: i32, %arg2: i32, %arg3: memref<16x32xbf16, #tpu.memory_space<vmem>>, %arg4: memref<32x64xbf16, #tpu.memory_space<vmem>>, %arg5: memref<1x64xf32, #tpu.memory_space<vmem>>, %arg6: memref<16x64xbf16, #tpu.memory_space<vmem>>, %arg7: memref<16x64xf32, #tpu.memory_space<vmem>>) attributes {dimension_semantics = [#tpu.dimension_semantics<parallel>, #tpu.dimension_semantics<parallel>, #tpu.dimension_semantics<arbitrary>], iteration_bounds = array<i64: 1, 1, 1>, scalar_prefetch = 0 : i64, scratch_operands = 1 : i64, tpu.core_type = #tpu.core_type<tc>, window_params = [{transform_indices = @transform_0, window_bounds = array<i64: 16, 32>}, {transform_indices = @transform_1, window_bounds = array<i64: 32, 64>}, {transform_indices = @transform_2, window_bounds = array<i64: 1, 64>}, {transform_indices = @transform_3, window_bounds = array<i64: 16, 64>}]} {
    %c0_i32 = arith.constant 0 : i32
    %0 = arith.cmpi eq, %arg2, %c0_i32 : i32
    %1 = arith.extui %0 : i1 to i32
    %c0_i32_0 = arith.constant 0 : i32
    %2 = arith.cmpi ne, %1, %c0_i32_0 : i32
    scf.if %2 {
      %cst_10 = arith.constant 0.000000e+00 : f32
      %12 = vector.broadcast %cst_10 : f32 to vector<16x64xf32>
      %c0_11 = arith.constant 0 : index
      %c0_12 = arith.constant 0 : index
      %13 = vector.load %arg7[%c0_11, %c0_12] : memref<16x64xf32, #tpu.memory_space<vmem>>, vector<16x64xf32>
      tpu.vector_store %arg7[%c0_11, %c0_12], %12 {strides = array<i32>} : memref<16x64xf32, #tpu.memory_space<vmem>>, vector<16x64xf32>,
    } else {
    }
    %c0 = arith.constant 0 : index
    %c0_1 = arith.constant 0 : index
    %3 = vector.load %arg7[%c0, %c0_1] : memref<16x64xf32, #tpu.memory_space<vmem>>, vector<16x64xf32>
    %c0_2 = arith.constant 0 : index
    %c0_3 = arith.constant 0 : index
    %4 = vector.load %arg3[%c0_2, %c0_3] : memref<16x32xbf16, #tpu.memory_space<vmem>>, vector<16x32xbf16>
    %c0_4 = arith.constant 0 : index
    %c0_5 = arith.constant 0 : index
    %5 = vector.load %arg4[%c0_4, %c0_5] : memref<32x64xbf16, #tpu.memory_space<vmem>>, vector<32x64xbf16>
    %cst = arith.constant dense<0.000000e+00> : vector<16x64xf32>
    %6 = tpu.matmul %4, %5, %cst {dimension_numbers = #tpu.dot_dimension_numbers<[1], [0], [0], [1], [0, 0, 1, 1], [], []>} : vector<16x32xbf16>, vector<32x64xbf16>, vector<16x64xf32> -> vector<16x64xf32>
    %7 = arith.addf %3, %6 : vector<16x64xf32>
    %c0_6 = arith.constant 0 : index
    %c0_7 = arith.constant 0 : index
    %8 = vector.load %arg7[%c0_6, %c0_7] : memref<16x64xf32, #tpu.memory_space<vmem>>, vector<16x64xf32>
    tpu.vector_store %arg7[%c0_6, %c0_7], %7 {strides = array<i32>} : memref<16x64xf32, #tpu.memory_space<vmem>>, vector<16x64xf32>,
    %c0_i32_8 = arith.constant 0 : i32
    %9 = arith.cmpi eq, %arg2, %c0_i32_8 : i32
    %10 = arith.extui %9 : i1 to i32
    %c0_i32_9 = arith.constant 0 : i32
    %11 = arith.cmpi ne, %10, %c0_i32_9 : i32
    scf.if %11 {
      %c0_10 = arith.constant 0 : index
      %c0_11 = arith.constant 0 : index
      %12 = vector.load %arg7[%c0_10, %c0_11] : memref<16x64xf32, #tpu.memory_space<vmem>>, vector<16x64xf32>
      %c0_12 = arith.constant 0 : index
      %c0_13 = arith.constant 0 : index
      %13 = vector.load %arg5[%c0_12, %c0_13] : memref<1x64xf32, #tpu.memory_space<vmem>>, vector<1x64xf32>
      %14 = vector.broadcast %13 : vector<1x64xf32> to vector<16x64xf32>
      %15 = arith.addf %12, %14 : vector<16x64xf32>
      %cst_14 = arith.constant 5.000000e-01 : f32
      %16 = vector.broadcast %cst_14 : f32 to vector<16x64xf32>
      %17 = arith.mulf %16, %15 : vector<16x64xf32>
      %cst_15 = arith.constant 4.471500e-02 : f32
      %18 = vector.broadcast %cst_15 : f32 to vector<16x64xf32>
      %19 = arith.mulf %18, %15 : vector<16x64xf32>
      %20 = arith.mulf %19, %15 : vector<16x64xf32>
      %21 = arith.mulf %20, %15 : vector<16x64xf32>
      %22 = arith.addf %15, %21 : vector<16x64xf32>
      %cst_16 = arith.constant 0.797884583 : f32
      %23 = vector.broadcast %cst_16 : f32 to vector<16x64xf32>
      %24 = arith.mulf %23, %22 : vector<16x64xf32>
      %25 = math.tanh %24 : vector<16x64xf32>
      %cst_17 = arith.constant 1.000000e+00 : f32
      %26 = vector.broadcast %cst_17 : f32 to vector<16x64xf32>
      %27 = arith.addf %26, %25 : vector<16x64xf32>
      %28 = arith.mulf %17, %27 : vector<16x64xf32>
      %29 = arith.truncf %28 : vector<16x64xf32> to vector<16x64xbf16>
      %c0_18 = arith.constant 0 : index
      %c0_19 = arith.constant 0 : index
      %30 = vector.load %arg6[%c0_18, %c0_19] : memref<16x64xbf16, #tpu.memory_space<vmem>>, vector<16x64xbf16>
      tpu.vector_store %arg6[%c0_18, %c0_19], %29 {strides = array<i32>} : memref<16x64xbf16, #tpu.memory_space<vmem>>, vector<16x64xbf16>,
    } else {
    }
    return
  }
  func.func @transform_0(%arg0: i32, %arg1: i32, %arg2: i32) -> (i32, i32) {
    %c0_i32 = arith.constant 0 : i32
    return %arg0, %arg2 : i32, i32
  }
  func.func @transform_1(%arg0: i32, %arg1: i32, %arg2: i32) -> (i32, i32) {
    %c0_i32 = arith.constant 0 : i32
    return %arg2, %arg1 : i32, i32
  }
  func.func @transform_2(%arg0: i32, %arg1: i32, %arg2: i32) -> (i32, i32) {
    %c0_i32 = arith.constant 0 : i32
    %c0_i32_0 = arith.constant 0 : i32
    return %c0_i32, %arg1 : i32, i32
  }
  func.func @transform_3(%arg0: i32, %arg1: i32, %arg2: i32) -> (i32, i32) {
    %c0_i32 = arith.constant 0 : i32
    return %arg0, %arg1 : i32, i32
  }
}

module attributes {stable_mosaic.version = 11 : i64} {
  func.func @_adapter_ln_kernel(%arg0: i32, %arg1: memref<16x32xbf16, #tpu.memory_space<vmem>>, %arg2: memref<16x32xbf16, #tpu.memory_space<vmem>>, %arg3: memref<32x16xbf16, #tpu.memory_space<vmem>>, %arg4: memref<1x16xf32, #tpu.memory_space<vmem>>, %arg5: memref<16x32xbf16, #tpu.memory_space<vmem>>, %arg6: memref<1x32xf32, #tpu.memory_space<vmem>>, %arg7: memref<1x32xf32, #tpu.memory_space<vmem>>, %arg8: memref<1x32xf32, #tpu.memory_space<vmem>>, %arg9: memref<16x32xbf16, #tpu.memory_space<vmem>>) attributes {dimension_semantics = [#tpu.dimension_semantics<parallel>], iteration_bounds = array<i64: 1>, scalar_prefetch = 0 : i64, scratch_operands = 0 : i64, tpu.core_type = #tpu.core_type<tc>, window_params = [{transform_indices = @transform_0, window_bounds = array<i64: 16, 32>}, {transform_indices = @transform_1, window_bounds = array<i64: 16, 32>}, {pipeline_mode = #tpu.pipeline_mode<synchronous>, transform_indices = @transform_2, window_bounds = array<i64: 32, 16>}, {pipeline_mode = #tpu.pipeline_mode<synchronous>, transform_indices = @transform_3, window_bounds = array<i64: 1, 16>}, {pipeline_mode = #tpu.pipeline_mode<synchronous>, transform_indices = @transform_4, window_bounds = array<i64: 16, 32>}, {pipeline_mode = #tpu.pipeline_mode<synchronous>, transform_indices = @transform_5, window_bounds = array<i64: 1, 32>}, {pipeline_mode = #tpu.pipeline_mode<synchronous>, transform_indices = @transform_6, window_bounds = array<i64: 1, 32>}, {pipeline_mode = #tpu.pipeline_mode<synchronous>, transform_indices = @transform_7, window_bounds = array<i64: 1, 32>}, {transform_indices = @transform_8, window_bounds = array<i64: 16, 32>}]} {
    %c0 = arith.constant 0 : index
    %c0_0 = arith.constant 0 : index
    %0 = vector.load %arg1[%c0, %c0_0] : memref<16x32xbf16, #tpu.memory_space<vmem>>, vector<16x32xbf16>
    %c0_1 = arith.constant 0 : index
    %c0_2 = arith.constant 0 : index
    %1 = vector.load %arg3[%c0_1, %c0_2] : memref<32x16xbf16, #tpu.memory_space<vmem>>, vector<32x16xbf16>
    %cst = arith.constant dense<0.000000e+00> : vector<16x16xf32>
    %2 = tpu.matmul %0, %1, %cst {dimension_numbers = #tpu.dot_dimension_numbers<[1], [0], [0], [1], [0, 0, 1, 1], [], []>} : vector<16x32xbf16>, vector<32x16xbf16>, vector<16x16xf32> -> vector<16x16xf32>
    %c0_3 = arith.constant 0 : index
    %c0_4 = arith.constant 0 : index
    %3 = vector.load %arg4[%c0_3, %c0_4] : memref<1x16xf32, #tpu.memory_space<vmem>>, vector<1x16xf32>
    %4 = vector.broadcast %3 : vector<1x16xf32> to vector<16x16xf32>
    %5 = arith.addf %2, %4 : vector<16x16xf32>
    %cst_5 = arith.constant 0.000000e+00 : f32
    %6 = vector.broadcast %cst_5 : f32 to vector<16x16xf32>
    %7 = arith.maximumf %5, %6 : vector<16x16xf32>
    %8 = arith.truncf %7 : vector<16x16xf32> to vector<16x16xbf16>
    %c0_6 = arith.constant 0 : index
    %c0_7 = arith.constant 0 : index
    %9 = vector.load %arg5[%c0_6, %c0_7] : memref<16x32xbf16, #tpu.memory_space<vmem>>, vector<16x32xbf16>
    %cst_8 = arith.constant dense<0.000000e+00> : vector<16x32xf32>
    %10 = tpu.matmul %8, %9, %cst_8 {dimension_numbers = #tpu.dot_dimension_numbers<[1], [0], [0], [1], [0, 0, 1, 1], [], []>} : vector<16x16xbf16>, vector<16x32xbf16>, vector<16x32xf32> -> vector<16x32xf32>
    %c0_9 = arith.constant 0 : index
    %c0_10 = arith.constant 0 : index
    %11 = vector.load %arg6[%c0_9, %c0_10] : memref<1x32xf32, #tpu.memory_space<vmem>>, vector<1x32xf32>
    %12 = vector.broadcast %11 : vector<1x32xf32> to vector<16x32xf32>
    %13 = arith.addf %10, %12 : vector<16x32xf32>
    %14 = arith.extf %0 : vector<16x32xbf16> to vector<16x32xf32>
    %15 = arith.addf %13, %14 : vector<16x32xf32>
    %c0_11 = arith.constant 0 : index
    %c0_12 = arith.constant 0 : index
    %16 = vector.load %arg2[%c0_11, %c0_12] : memref<16x32xbf16, #tpu.memory_space<vmem>>, vector<16x32xbf16>
    %17 = arith.extf %16 : vector<16x32xbf16> to vector<16x32xf32>
    %18 = arith.addf %15, %17 : vector<16x32xf32>
    %cst_13 = arith.constant dense<0.000000e+00> : vector<16xf32>
    %19 = vector.multi_reduction <add>, %18, %cst_13 [1] : vector<16x32xf32> to vector<16xf32>
    %20 = vector.shape_cast %19 : vector<16xf32> to vector<16x1xf32>
    %cst_14 = arith.constant 3.200000e+01 : f32
    %21 = vector.broadcast %cst_14 : f32 to vector<16x1xf32>
    %22 = arith.divf %20, %21 : vector<16x1xf32>
    %23 = vector.broadcast %22 : vector<16x1xf32> to vector<16x32xf32>
    %24 = arith.subf %18, %23 : vector<16x32xf32>
    %25 = arith.mulf %24, %24 : vector<16x32xf32>
    %cst_15 = arith.constant dense<0.000000e+00> : vector<16xf32>
    %26 = vector.multi_reduction <add>, %25, %cst_15 [1] : vector<16x32xf32> to vector<16xf32>
    %27 = vector.shape_cast %26 : vector<16xf32> to vector<16x1xf32>
    %cst_16 = arith.constant 3.200000e+01 : f32
    %28 = vector.broadcast %cst_16 : f32 to vector<16x1xf32>
    %29 = arith.divf %27, %28 : vector<16x1xf32>
    %30 = vector.broadcast %22 : vector<16x1xf32> to vector<16x32xf32>
    %31 = arith.subf %18, %30 : vector<16x32xf32>
    %cst_17 = arith.constant 9.99999996E-13 : f32
    %32 = vector.broadcast %cst_17 : f32 to vector<16x1xf32>
    %33 = arith.addf %29, %32 : vector<16x1xf32>
    %34 = math.rsqrt %33 : vector<16x1xf32>
    %35 = vector.broadcast %34 : vector<16x1xf32> to vector<16x32xf32>
    %36 = arith.mulf %31, %35 : vector<16x32xf32>
    %c0_18 = arith.constant 0 : index
    %c0_19 = arith.constant 0 : index
    %37 = vector.load %arg7[%c0_18, %c0_19] : memref<1x32xf32, #tpu.memory_space<vmem>>, vector<1x32xf32>
    %38 = vector.broadcast %37 : vector<1x32xf32> to vector<16x32xf32>
    %39 = arith.mulf %36, %38 : vector<16x32xf32>
    %c0_20 = arith.constant 0 : index
    %c0_21 = arith.constant 0 : index
    %40 = vector.load %arg8[%c0_20, %c0_21] : memref<1x32xf32, #tpu.memory_space<vmem>>, vector<1x32xf32>
    %41 = vector.broadcast %40 : vector<1x32xf32> to vector<16x32xf32>
    %42 = arith.addf %39, %41 : vector<16x32xf32>
    %43 = arith.truncf %42 : vector<16x32xf32> to vector<16x32xbf16>
    %c0_22 = arith.constant 0 : index
    %c0_23 = arith.constant 0 : index
    %44 = vector.load %arg9[%c0_22, %c0_23] : memref<16x32xbf16, #tpu.memory_space<vmem>>, vector<16x32xbf16>
    tpu.vector_store %arg9[%c0_22, %c0_23], %43 {strides = array<i32>} : memref<16x32xbf16, #tpu.memory_space<vmem>>, vector<16x32xbf16>,
    return
  }
  func.func @transform_0(%arg0: i32) -> (i32, i32) {
    %c0_i32 = arith.constant 0 : i32
    %c0_i32_0 = arith.constant 0 : i32
    return %arg0, %c0_i32 : i32, i32
  }
  func.func @transform_1(%arg0: i32) -> (i32, i32) {
    %c0_i32 = arith.constant 0 : i32
    %c0_i32_0 = arith.constant 0 : i32
    return %arg0, %c0_i32 : i32, i32
  }
  func.func @transform_2(%arg0: i32) -> (i32, i32) {
    %c0_i32 = arith.constant 0 : i32
    %c0_i32_0 = arith.constant 0 : i32
    %c0_i32_1 = arith.constant 0 : i32
    return %c0_i32, %c0_i32_0 : i32, i32
  }
  func.func @transform_3(%arg0: i32) -> (i32, i32) {
    %c0_i32 = arith.constant 0 : i32
    %c0_i32_0 = arith.constant 0 : i32
    %c0_i32_1 = arith.constant 0 : i32
    return %c0_i32, %c0_i32_0 : i32, i32
  }
  func.func @transform_4(%arg0: i32) -> (i32, i32) {
    %c0_i32 = arith.constant 0 : i32
    %c0_i32_0 = arith.constant 0 : i32
    %c0_i32_1 = arith.constant 0 : i32
    return %c0_i32, %c0_i32_0 : i32, i32
  }
  func.func @transform_5(%arg0: i32) -> (i32, i32) {
    %c0_i32 = arith.constant 0 : i32
    %c0_i32_0 = arith.constant 0 : i32
    %c0_i32_1 = arith.constant 0 : i32
    return %c0_i32, %c0_i32_0 : i32, i32
  }
  func.func @transform_6(%arg0: i32) -> (i32, i32) {
    %c0_i32 = arith.constant 0 : i32
    %c0_i32_0 = arith.constant 0 : i32
    %c0_i32_1 = arith.constant 0 : i32
    return %c0_i32, %c0_i32_0 : i32, i32
  }
  func.func @transform_7(%arg0: i32) -> (i32, i32) {
    %c0_i32 = arith.constant 0 : i32
    %c0_i32_0 = arith.constant 0 : i32
    %c0_i32_1 = arith.constant 0 : i32
    return %c0_i32, %c0_i32_0 : i32, i32
  }
  func.func @transform_8(%arg0: i32) -> (i32, i32) {
    %c0_i32 = arith.constant 0 : i32
    %c0_i32_0 = arith.constant 0 : i32
    return %arg0, %c0_i32 : i32, i32
  }
}

</mosaic_0001>

<llo_original>
// kernel: adapter_bert_forward.16
$region0: #{adapter_bert_forward.16}
  #allocation0 [shape = 'u32[]', space=smem, size = 0x4, offset = 0x4, fixed_abs, tag = 'smem constant byte address 0x4 - core index']
  #allocation1 [shape = 'u32[144,128]{1,0:T(1,128)}', space=vmem, size = 0x12000, scoped, tag = 'internal scratch']
  %s0 = inlined_call_operand.vmem [shape: bf16[16,32], index: 0, kind: input, shape index: {}]
  %s1 = inlined_call_operand.vmem [shape: bf16[32,32], index: 1, kind: input, shape index: {}]
  %s2 = inlined_call_operand.vmem [shape: f32[1,32], index: 2, kind: input, shape index: {}]
  %s3 = inlined_call_operand.vmem [shape: bf16[16,32], index: 3, kind: input, shape index: {}]
  %s4 = inlined_call_operand.vmem [shape: f32[1,32], index: 4, kind: input, shape index: {}]
  %s5 = inlined_call_operand.vmem [shape: f32[1,32], index: 5, kind: input, shape index: {}]
  %s6 = inlined_call_operand.vmem [shape: bf16[16,32], index: 6, kind: output, shape index: {}]
  %s7 = sld [smem:[#allocation0]]
  $region34: #{adapter_bert_forward.16} parent=0
    _
  %s9 = ssub.s32 1, %s7
  %s10 = scalar_select 0, %s9, %s7
  // Predicated region
  $region2: #{adapter_bert_forward.16} parent=0 // pred_check
    _
  $region3: #{adapter_bert_forward.16} parent=0 // pred_check_branch
    %12 = sbr.rel (0) target = $region5
  $region4: #{adapter_bert_forward.16} parent=0 // pred_region
    _
  $region5: #{adapter_bert_forward.16} parent=0 // pred_fallthru
    _
  // Predicated region
  $region6: #{adapter_bert_forward.16} parent=0 // pred_check
    _
  $region7: #{adapter_bert_forward.16} parent=0 // pred_check_branch
    %14 = sbr.rel (0) target = $region9
  $region8: #{adapter_bert_forward.16} parent=0 // pred_region
    _
  $region9: #{adapter_bert_forward.16} parent=0 // pred_fallthru
    _
  // Predicated region
  $region10: #{adapter_bert_forward.16} parent=0 // pred_check
    _
  $region11: #{adapter_bert_forward.16} parent=0 // pred_check_branch
    %16 = sbr.rel (0) target = $region13
  $region12: #{adapter_bert_forward.16} parent=0 // pred_region
    _
  $region13: #{adapter_bert_forward.16} parent=0 // pred_fallthru
    _
  // Predicated region
  $region14: #{adapter_bert_forward.16} parent=0 // pred_check
    _
  $region15: #{adapter_bert_forward.16} parent=0 // pred_check_branch
    %18 = sbr.rel (0) target = $region17
  $region16: #{adapter_bert_forward.16} parent=0 // pred_region
    _
  $region17: #{adapter_bert_forward.16} parent=0 // pred_fallthru
    _
  // Predicated region
  $region18: #{adapter_bert_forward.16} parent=0 // pred_check
    _
  $region19: #{adapter_bert_forward.16} parent=0 // pred_check_branch
    %20 = sbr.rel (0) target = $region21
  $region20: #{adapter_bert_forward.16} parent=0 // pred_region
    _
  $region21: #{adapter_bert_forward.16} parent=0 // pred_fallthru
    _
  // Predicated region
  $region22: #{adapter_bert_forward.16} parent=0 // pred_check
    _
  $region23: #{adapter_bert_forward.16} parent=0 // pred_check_branch
    %22 = sbr.rel (0) target = $region25
  $region24: #{adapter_bert_forward.16} parent=0 // pred_region
    _
  $region25: #{adapter_bert_forward.16} parent=0 // pred_fallthru
    _
  %v24 = vld [vmem:[%s0] sm:$0xf]
  %v25 = vld [vmem:[%s0 + $0x4] sm:$0xf]
  %v26 = vld [vmem:[%s1] sm:$0xf]
  %v27 = vld [vmem:[%s1 + $0x4] sm:$0xf]
  %v28 = vld [vmem:[%s1 + $0x8] sm:$0xf]
  %v29 = vld [vmem:[%s1 + $0xc] sm:$0xf]
  %v30 = vld [vmem:[%s2] sm:$0x1]
  %v32 = vlaneseq
  %v33 = vshrl.u32 %v32, 7
  %v34 = vsub.s32 0, %v33
  %v35 = vrot.slane %v30, %v34
  %v39 = vunpack.c.l.b16 %v24
  %v40 = vunpack.c.l.b16 %v25
  %v41 = vpack.c.b16 %v40, %v39
  %v46 = vunpack.c.l.b16 %v26
  %v47 = vunpack.c.l.b16 %v27
  %v48 = vunpack.c.l.b16 %v28
  %v49 = vunpack.c.l.b16 %v29
  %v50 = vpack.c.b16 %v47, %v46
  %v51 = vpack.c.b16 %v49, %v48
  %vm54 = vcmask 261120
  %v56 = vsel %vm54, %v41, 0
  %58 = vmatprep.subr.bf16.mxu0 0
  %59 = vmatpush1.bf16.msra.mxu0 %v50
  %60 = vmatprep.subr.bf16.mxu0 0
  %61 = vmatpush1.bf16.msra.mxu0 %v51
  %62 = vmatprep.subr.bf16.mxu0 0
  %63 = vmatpush1.bf16.msra.mxu0 0
  %64 = vmatprep.subr.bf16.mxu0 0
  %65 = vmatpush1.bf16.msra.mxu0 0
  %66 = vmatprep.subr.bf16.mxu0 0
  %67 = vmatpush1.bf16.msra.mxu0 0
  %68 = vmatprep.subr.bf16.mxu0 0
  %69 = vmatpush1.bf16.msra.mxu0 0
  %70 = vmatprep.subr.bf16.mxu0 0
  %71 = vmatpush1.bf16.msra.mxu0 0
  %72 = vmatprep.subr.bf16.mxu0 0
  %73 = vmatpush1.bf16.msra.mxu0 0
  %74 = vmatprep.subr.bf16.mxu0 0
  %75 = vmatpush1.bf16.msra.mxu0 0
  %76 = vmatprep.subr.bf16.mxu0 0
  %77 = vmatpush1.bf16.msra.mxu0 0
  %78 = vmatprep.subr.bf16.mxu0 0
  %79 = vmatpush1.bf16.msra.mxu0 0
  %80 = vmatprep.subr.bf16.mxu0 0
  %81 = vmatpush1.bf16.msra.mxu0 0
  %82 = vmatprep.subr.bf16.mxu0 0
  %83 = vmatpush1.bf16.msra.mxu0 0
  %84 = vmatprep.subr.bf16.mxu0 0
  %85 = vmatpush1.bf16.msra.mxu0 0
  %86 = vmatprep.subr.bf16.mxu0 0
  %87 = vmatpush1.bf16.msra.mxu0 0
  %88 = vmatprep.subr.bf16.mxu0 0
  %89 = vmatpush1.bf16.msra.mxu0 0
  %90 = vmatprep.mubr.bf16.mxu0 0
  %91 = vmatmul.mubr.bf16.gmra.mrb[0].mxu0 %v56
  %v92 = vpop.f32.mrb[0].mxu0
  %v93 = vadd.f32 %v35, %v92
  %v94 = vpop.f32.mrb[0].mxu0
  %v95 = vpop.f32.mrb[0].mxu0
  %v96 = vadd.f32 %v35, %v95
  %v97 = vpop.f32.mrb[0].mxu0
  %98 = vdwg.mxu0
  %v99 = vld [vmem:[%s3] sm:$0xf]
  %v100 = vld [vmem:[%s3 + $0x4] sm:$0xf]
  %v101 = vunpack.c.l.bf16 %v99
  %v102 = vunpack.c.l.bf16 %v100
  %v103 = vadd.f32 %v93, %v101
  %v104 = vadd.f32 %v96, %v102
  %v105 = vsel %vm54, %v103, 0.0
  %106 = vadd.xlane.f32.xlu0 %v105
  %v107 = vpop.xlane.xlu0 %106
  %v108 = vsel %vm54, %v104, 0.0
  %109 = vadd.xlane.f32.xlu0 %v108
  %v110 = vpop.xlane.xlu0 %109
  %v111 = vrcp.pop 32.0
  %v112 = vmul.f32 %v107, %v111
  %v113 = vmul.f32 %v110, %v111
  %v114 = vsub.f32 %v103, %v112
  %v115 = vsub.f32 %v104, %v113
  %v116 = vmul.f32 %v114, %v114
  %v117 = vmul.f32 %v115, %v115
  %v118 = vsel %vm54, %v116, 0.0
  %119 = vadd.xlane.f32.xlu0 %v118
  %v120 = vpop.xlane.xlu0 %119
  %v121 = vsel %vm54, %v117, 0.0
  %122 = vadd.xlane.f32.xlu0 %v121
  %v123 = vpop.xlane.xlu0 %122
  %v124 = vmul.f32 %v120, %v111
  %v125 = vmul.f32 %v123, %v111
  %v126 = vadd.f32 %v124, 1e-12
  %v127 = vadd.f32 %v125, 1e-12
  %v128 = vrsqrt.pop %v126
  %v129 = vrsqrt.pop %v127
  %v130 = vmul.f32 %v114, %v128
  %v131 = vmul.f32 %v115, %v129
  %v132 = vld [vmem:[%s4] sm:$0x1]
  %v134 = vlaneseq
  %v135 = vshrl.u32 %v134, 7
  %v136 = vsub.s32 0, %v135
  %v137 = vrot.slane %v132, %v136
  %v139 = vmul.f32 %v130, %v137
  %v140 = vmul.f32 %v131, %v137
  %v141 = vld [vmem:[%s5] sm:$0x1]
  %v143 = vlaneseq
  %v144 = vshrl.u32 %v143, 7
  %v145 = vsub.s32 0, %v144
  %v146 = vrot.slane %v141, %v145
  %v148 = vadd.f32 %v139, %v146
  %v149 = vadd.f32 %v140, %v146
  %v150 = vpack.c.bf16 %v149, %v148
  %v152 = vunpack.c.l.b16 %v150
  %v153 = vunpack.c.h.b16 %v150
  %v154 = vpack.c.b16 %v152, %v152
  %v155 = vpack.c.b16 %v153, %v153
  %vm158 = vcmask 257024
  %159 = vst.msk [vmem:[%s6] sm:$0xf] %vm158, %v154
  %160 = vst.msk [vmem:[%s6 + $0x4] sm:$0xf] %vm158, %v155
  // Predicated region
  $region26: #{adapter_bert_forward.16} parent=0 // pred_check
    _
  $region27: #{adapter_bert_forward.16} parent=0 // pred_check_branch
    %162 = sbr.rel (0) target = $region29
  $region28: #{adapter_bert_forward.16} parent=0 // pred_region
    _
  $region29: #{adapter_bert_forward.16} parent=0 // pred_fallthru
    _
  // Predicated region
  $region30: #{adapter_bert_forward.16} parent=0 // pred_check
    _
  $region31: #{adapter_bert_forward.16} parent=0 // pred_check_branch
    %164 = sbr.rel (0) target = $region33
  $region32: #{adapter_bert_forward.16} parent=0 // pred_region
    _
  $region33: #{adapter_bert_forward.16} parent=0 // pred_fallthru
    _

// kernel: adapter_bert_forward.14
$region0: #{adapter_bert_forward.14}
  #allocation0 [shape = 'u32[]', space=smem, size = 0x4, offset = 0x4, fixed_abs, tag = 'smem constant byte address 0x4 - core index']
  #allocation1 [shape = 'u32[144,128]{1,0:T(1,128)}', space=vmem, size = 0x12000, scoped, tag = 'internal scratch']
  #allocation2 [shape = 'f32[16,96]{1,0:T(8,128)}', space=vmem, size = 0x2000, scoped, tag = 'scratch operand']
  %s0 = inlined_call_operand.vmem [shape: bf16[16,32], index: 0, kind: input, shape index: {}]
  %s1 = inlined_call_operand.vmem [shape: bf16[32,96], index: 1, kind: input, shape index: {}]
  %s2 = inlined_call_operand.vmem [shape: f32[1,96], index: 2, kind: input, shape index: {}]
  %s3 = inlined_call_operand.vmem [shape: bf16[16,96], index: 3, kind: output, shape index: {}]
  %s4 = sld [smem:[#allocation0]]
  $region30: #{adapter_bert_forward.14} parent=0
    _
  %s6 = ssub.s32 1, %s4
  %s7 = scalar_select 0, %s6, %s4
  // Predicated region
  $region2: #{adapter_bert_forward.14} parent=0 // pred_check
    _
  $region3: #{adapter_bert_forward.14} parent=0 // pred_check_branch
    %9 = sbr.rel (0) target = $region5
  $region4: #{adapter_bert_forward.14} parent=0 // pred_region
    _
  $region5: #{adapter_bert_forward.14} parent=0 // pred_fallthru
    _
  // Predicated region
  $region6: #{adapter_bert_forward.14} parent=0 // pred_check
    _
  $region7: #{adapter_bert_forward.14} parent=0 // pred_check_branch
    %11 = sbr.rel (0) target = $region9
  $region8: #{adapter_bert_forward.14} parent=0 // pred_region
    _
  $region9: #{adapter_bert_forward.14} parent=0 // pred_fallthru
    _
  // Predicated region
  $region10: #{adapter_bert_forward.14} parent=0 // pred_check
    _
  $region11: #{adapter_bert_forward.14} parent=0 // pred_check_branch
    %13 = sbr.rel (0) target = $region13
  $region12: #{adapter_bert_forward.14} parent=0 // pred_region
    _
  $region13: #{adapter_bert_forward.14} parent=0 // pred_fallthru
    _
  %p15 = scmp.eq.s32.totalorder 0, 0
  // Predicated region
  $region14: #{adapter_bert_forward.14} parent=0 // pred_check
    %p16 = pneg %p15
  $region15: #{adapter_bert_forward.14} parent=0 // pred_check_branch
    %18 = sbr.rel (%p16) target = $region17
  $region16: #{adapter_bert_forward.14} parent=0 // pred_region
    %vm19 = vcmask 785408
    %20 = vst.msk [vmem:[#allocation2] sm:$0xff] %vm19, 0.0
    %21 = vst.msk [vmem:[#allocation2 + $0x8] sm:$0xff] %vm19, 0.0
  $region17: #{adapter_bert_forward.14} parent=0 // pred_fallthru
    _
  %v22 = vld [vmem:[#allocation2] sm:$0xff]
  %v23 = vld [vmem:[#allocation2 + $0x8] sm:$0xff]
  %v24 = vld [vmem:[%s0] sm:$0xf]
  %v25 = vld [vmem:[%s0 + $0x4] sm:$0xf]
  %v26 = vld [vmem:[%s1] sm:$0xf]
  %v27 = vld [vmem:[%s1 + $0x4] sm:$0xf]
  %v28 = vld [vmem:[%s1 + $0x8] sm:$0xf]
  %v29 = vld [vmem:[%s1 + $0xc] sm:$0xf]
  %v32 = vunpack.c.l.b16 %v24
  %v33 = vunpack.c.l.b16 %v25
  %v34 = vpack.c.b16 %v33, %v32
  %v39 = vunpack.c.l.b16 %v26
  %v40 = vunpack.c.l.b16 %v27
  %v41 = vunpack.c.l.b16 %v28
  %v42 = vunpack.c.l.b16 %v29
  %v43 = vpack.c.b16 %v40, %v39
  %v44 = vpack.c.b16 %v42, %v41
  %vm47 = vcmask 261120
  %v49 = vsel %vm47, %v34, 0
  %51 = vmatprep.subr.bf16.mxu0 0
  %52 = vmatpush1.bf16.msra.mxu0 %v43
  %53 = vmatprep.subr.bf16.mxu0 0
  %54 = vmatpush1.bf16.msra.mxu0 %v44
  %55 = vmatprep.subr.bf16.mxu0 0
  %56 = vmatpush1.bf16.msra.mxu0 0
  %57 = vmatprep.subr.bf16.mxu0 0
  %58 = vmatpush1.bf16.msra.mxu0 0
  %59 = vmatprep.subr.bf16.mxu0 0
  %60 = vmatpush1.bf16.msra.mxu0 0
  %61 = vmatprep.subr.bf16.mxu0 0
  %62 = vmatpush1.bf16.msra.mxu0 0
  %63 = vmatprep.subr.bf16.mxu0 0
  %64 = vmatpush1.bf16.msra.mxu0 0
  %65 = vmatprep.subr.bf16.mxu0 0
  %66 = vmatpush1.bf16.msra.mxu0 0
  %67 = vmatprep.subr.bf16.mxu0 0
  %68 = vmatpush1.bf16.msra.mxu0 0
  %69 = vmatprep.subr.bf16.mxu0 0
  %70 = vmatpush1.bf16.msra.mxu0 0
  %71 = vmatprep.subr.bf16.mxu0 0
  %72 = vmatpush1.bf16.msra.mxu0 0
  %73 = vmatprep.subr.bf16.mxu0 0
  %74 = vmatpush1.bf16.msra.mxu0 0
  %75 = vmatprep.subr.bf16.mxu0 0
  %76 = vmatpush1.bf16.msra.mxu0 0
  %77 = vmatprep.subr.bf16.mxu0 0
  %78 = vmatpush1.bf16.msra.mxu0 0
  %79 = vmatprep.subr.bf16.mxu0 0
  %80 = vmatpush1.bf16.msra.mxu0 0
  %81 = vmatprep.subr.bf16.mxu0 0
  %82 = vmatpush1.bf16.msra.mxu0 0
  %83 = vmatprep.mubr.bf16.mxu0 0
  %84 = vmatmul.mubr.bf16.gmra.mrb[0].mxu0 %v49
  %v85 = vpop.f32.mrb[0].mxu0
  %v86 = vadd.f32 0.0, %v85
  %v87 = vpop.f32.mrb[0].mxu0
  %v88 = vpop.f32.mrb[0].mxu0
  %v89 = vadd.f32 0.0, %v88
  %v90 = vpop.f32.mrb[0].mxu0
  %91 = vdwg.mxu0
  %v92 = vadd.f32 %v22, %v86
  %v93 = vadd.f32 %v23, %v89
  %vm94 = vcmask 785408
  %95 = vst.msk [vmem:[#allocation2] sm:$0xff] %vm94, %v92
  %96 = vst.msk [vmem:[#allocation2 + $0x8] sm:$0xff] %vm94, %v93
  // Predicated region
  $region18: #{adapter_bert_forward.14} parent=0 // pred_check
    %p97 = pneg %p15
  $region19: #{adapter_bert_forward.14} parent=0 // pred_check_branch
    %99 = sbr.rel (%p97) target = $region21
  $region20: #{adapter_bert_forward.14} parent=0 // pred_region
    %v100 = vld [vmem:[#allocation2] sm:$0xff]
    %v101 = vld [vmem:[#allocation2 + $0x8] sm:$0xff]
    %v102 = vld [vmem:[%s2] sm:$0x1]
    %v104 = vlaneseq
    %v105 = vshrl.u32 %v104, 7
    %v106 = vsub.s32 0, %v105
    %v107 = vrot.slane %v102, %v106
    %v109 = vadd.f32 %v100, %v107
    %v110 = vadd.f32 %v101, %v107
    %v111 = vpack.c.bf16 %v110, %v109
    %v113 = vunpack.c.l.b16 %v111
    %v114 = vunpack.c.h.b16 %v111
    %v115 = vpack.c.b16 %v113, %v113
    %v116 = vpack.c.b16 %v114, %v114
    %vm119 = vcmask 781312
    %120 = vst.msk [vmem:[%s3] sm:$0xf] %vm119, %v115
    %121 = vst.msk [vmem:[%s3 + $0x4] sm:$0xf] %vm119, %v116
  $region21: #{adapter_bert_forward.14} parent=0 // pred_fallthru
    _
  // Predicated region
  $region22: #{adapter_bert_forward.14} parent=0 // pred_check
    _
  $region23: #{adapter_bert_forward.14} parent=0 // pred_check_branch
    %123 = sbr.rel (0) target = $region25
  $region24: #{adapter_bert_forward.14} parent=0 // pred_region
    _
  $region25: #{adapter_bert_forward.14} parent=0 // pred_fallthru
    _
  // Predicated region
  $region26: #{adapter_bert_forward.14} parent=0 // pred_check
    _
  $region27: #{adapter_bert_forward.14} parent=0 // pred_check_branch
    %125 = sbr.rel (0) target = $region29
  $region28: #{adapter_bert_forward.14} parent=0 // pred_region
    _
  $region29: #{adapter_bert_forward.14} parent=0 // pred_fallthru
    _

// kernel: adapter_bert_forward.13
$region0: #{adapter_bert_forward.13}
  #allocation0 [shape = 'u32[]', space=smem, size = 0x4, offset = 0x4, fixed_abs, tag = 'smem constant byte address 0x4 - core index']
  #allocation1 [shape = 'u32[144,128]{1,0:T(1,128)}', space=vmem, size = 0x12000, scoped, tag = 'internal scratch']
  %s0 = inlined_call_operand.vmem [shape: f32[16,32], index: 0, kind: input, shape index: {}]
  %s1 = inlined_call_operand.vmem [shape: f32[1,32], index: 1, kind: input, shape index: {}]
  %s2 = inlined_call_operand.vmem [shape: f32[1,32], index: 2, kind: input, shape index: {}]
  %s3 = inlined_call_operand.vmem [shape: bf16[16,32], index: 3, kind: output, shape index: {}]
  %s4 = sld [smem:[#allocation0]]
  $region22: #{adapter_bert_forward.13} parent=0
    _
  %s6 = ssub.s32 1, %s4
  %s7 = scalar_select 0, %s6, %s4
  // Predicated region
  $region2: #{adapter_bert_forward.13} parent=0 // pred_check
    _
  $region3: #{adapter_bert_forward.13} parent=0 // pred_check_branch
    %9 = sbr.rel (0) target = $region5
  $region4: #{adapter_bert_forward.13} parent=0 // pred_region
    _
  $region5: #{adapter_bert_forward.13} parent=0 // pred_fallthru
    _
  // Predicated region
  $region6: #{adapter_bert_forward.13} parent=0 // pred_check
    _
  $region7: #{adapter_bert_forward.13} parent=0 // pred_check_branch
    %11 = sbr.rel (0) target = $region9
  $region8: #{adapter_bert_forward.13} parent=0 // pred_region
    _
  $region9: #{adapter_bert_forward.13} parent=0 // pred_fallthru
    _
  // Predicated region
  $region10: #{adapter_bert_forward.13} parent=0 // pred_check
    _
  $region11: #{adapter_bert_forward.13} parent=0 // pred_check_branch
    %13 = sbr.rel (0) target = $region13
  $region12: #{adapter_bert_forward.13} parent=0 // pred_region
    _
  $region13: #{adapter_bert_forward.13} parent=0 // pred_fallthru
    _
  %v14 = vld [vmem:[%s0] sm:$0xff]
  %v15 = vld [vmem:[%s0 + $0x8] sm:$0xff]
  %vm16 = vcmask 261120
  %v17 = vsel %vm16, %v14, 0.0
  %18 = vadd.xlane.f32.xlu0 %v17
  %v19 = vpop.xlane.xlu0 %18
  %v20 = vsel %vm16, %v15, 0.0
  %21 = vadd.xlane.f32.xlu0 %v20
  %v22 = vpop.xlane.xlu0 %21
  %v23 = vrcp.pop 32.0
  %v24 = vmul.f32 %v19, %v23
  %v25 = vmul.f32 %v22, %v23
  %v26 = vsub.f32 %v14, %v24
  %v27 = vsub.f32 %v15, %v25
  %v28 = vmul.f32 %v26, %v26
  %v29 = vmul.f32 %v27, %v27
  %v30 = vsel %vm16, %v28, 0.0
  %31 = vadd.xlane.f32.xlu0 %v30
  %v32 = vpop.xlane.xlu0 %31
  %v33 = vsel %vm16, %v29, 0.0
  %34 = vadd.xlane.f32.xlu0 %v33
  %v35 = vpop.xlane.xlu0 %34
  %v36 = vmul.f32 %v32, %v23
  %v37 = vmul.f32 %v35, %v23
  %v38 = vadd.f32 %v36, 1e-12
  %v39 = vadd.f32 %v37, 1e-12
  %v40 = vrsqrt.pop %v38
  %v41 = vrsqrt.pop %v39
  %v42 = vmul.f32 %v26, %v40
  %v43 = vmul.f32 %v27, %v41
  %v44 = vld [vmem:[%s1] sm:$0x1]
  %v46 = vlaneseq
  %v47 = vshrl.u32 %v46, 7
  %v48 = vsub.s32 0, %v47
  %v49 = vrot.slane %v44, %v48
  %v51 = vmul.f32 %v42, %v49
  %v52 = vmul.f32 %v43, %v49
  %v53 = vld [vmem:[%s2] sm:$0x1]
  %v55 = vlaneseq
  %v56 = vshrl.u32 %v55, 7
  %v57 = vsub.s32 0, %v56
  %v58 = vrot.slane %v53, %v57
  %v60 = vadd.f32 %v51, %v58
  %v61 = vadd.f32 %v52, %v58
  %v62 = vpack.c.bf16 %v61, %v60
  %v64 = vunpack.c.l.b16 %v62
  %v65 = vunpack.c.h.b16 %v62
  %v66 = vpack.c.b16 %v64, %v64
  %v67 = vpack.c.b16 %v65, %v65
  %vm70 = vcmask 257024
  %71 = vst.msk [vmem:[%s3] sm:$0xf] %vm70, %v66
  %72 = vst.msk [vmem:[%s3 + $0x4] sm:$0xf] %vm70, %v67
  // Predicated region
  $region14: #{adapter_bert_forward.13} parent=0 // pred_check
    _
  $region15: #{adapter_bert_forward.13} parent=0 // pred_check_branch
    %74 = sbr.rel (0) target = $region17
  $region16: #{adapter_bert_forward.13} parent=0 // pred_region
    _
  $region17: #{adapter_bert_forward.13} parent=0 // pred_fallthru
    _
  // Predicated region
  $region18: #{adapter_bert_forward.13} parent=0 // pred_check
    _
  $region19: #{adapter_bert_forward.13} parent=0 // pred_check_branch
    %76 = sbr.rel (0) target = $region21
  $region20: #{adapter_bert_forward.13} parent=0 // pred_region
    _
  $region21: #{adapter_bert_forward.13} parent=0 // pred_fallthru
    _

// kernel: adapter_bert_forward.15
$region0: #{adapter_bert_forward.15}
  #allocation0 [shape = 'u32[]', space=smem, size = 0x4, offset = 0x4, fixed_abs, tag = 'smem constant byte address 0x4 - core index']
  #allocation1 [shape = 'u32[144,128]{1,0:T(1,128)}', space=vmem, size = 0x12000, scoped, tag = 'internal scratch']
  %s0 = inlined_call_operand.vmem [shape: bf16[2,8,96], index: 0, kind: input, shape index: {}]
  %s1 = inlined_call_operand.vmem [shape: f32[2,1,8], index: 1, kind: input, shape index: {}]
  %s2 = inlined_call_operand.vmem [shape: bf16[2,8,32], index: 2, kind: output, shape index: {}]
  %s3 = sld [smem:[#allocation0]]
  $region41: #{adapter_bert_forward.15} parent=0
    _
  %s5 = ssub.s32 1, %s3
  %s6 = scalar_select 0, %s5, %s3
  loop: start=0, step=1, limit=4
  $region2: #{adapter_bert_forward.15} parent=0 // loop_pre_header
    _
  $region3: #{adapter_bert_forward.15} parent=0 // loop_header
    %s8 = sphi 0, %s12
    %p9 = scmp.ge.s32.totalorder %s8, 4
    %s18 = sphi 0, %s20
    %s21 = sphi 0, %s18
    %s22 = sphi 0, %s21
    %s38 = sphi 0, %s22
    %s44 = sphi 0, %s46
    %s47 = sphi 0, %s44
    %s48 = sphi 0, %s47
    %s64 = sphi 0, %s48
    %s70 = sphi 0, %s72
    %s73 = sphi 0, %s70
    %s74 = sphi 0, %s73
    %s90 = sphi 0, %s74
  $region4: #{adapter_bert_forward.15} parent=0 // loop_header_branch
    %11 = sbr.rel (%p9) target = $region8
  $region5: #{adapter_bert_forward.15} parent=0 // loop_body
    %s13 = ssub.s32 %s8, 1
    %s14 = ssub.s32 %s8, 2
    %s15 = sadd.s32 %s8, 1
    %s16 = ssub.s32 %s8, %s15
    %p17 = scmp.eq.s32.totalorder %s16, 0
    %s19 = sadd.s32 %s18, 1
    %s20 = scalar_select %p17, %s18, %s19
    %p23 = pneg %p17
    %p24 = scmp.eq.s32.totalorder %s8, 1
    %p25 = por %p23, %p24
    %p26 = scmp.ne.s32.totalorder %s18, %s21
    %p27 = scmp.eq.s32.totalorder %s8, 0
    %p28 = por %p26, %p27
    %p29 = scmp.ne.s32.totalorder %s18, %s21
    %p30 = scmp.eq.s32.totalorder %s13, 1
    %p31 = por %p29, %p30
    %p32 = scmp.ne.s32.totalorder %s21, %s22
    %p33 = scmp.eq.s32.totalorder %s13, 0
    %p34 = por %p32, %p33
    %p35 = scmp.ne.s32.totalorder %s21, %s22
    %p36 = scmp.eq.s32.totalorder %s14, 1
    %p37 = por %p35, %p36
    %p39 = scmp.ne.s32.totalorder %s22, %s38
    %p40 = scmp.eq.s32.totalorder %s14, 0
    %p41 = por %p39, %p40
    %s42 = ssub.s32 %s8, %s15
    %p43 = scmp.eq.s32.totalorder %s42, 0
    %s45 = sadd.s32 %s44, 1
    %s46 = scalar_select %p43, %s44, %s45
    %p49 = pneg %p43
    %p50 = scmp.eq.s32.totalorder %s8, 1
    %p51 = por %p49, %p50
    %p52 = scmp.ne.s32.totalorder %s44, %s47
    %p53 = scmp.eq.s32.totalorder %s8, 0
    %p54 = por %p52, %p53
    %p55 = scmp.ne.s32.totalorder %s44, %s47
    %p56 = scmp.eq.s32.totalorder %s13, 1
    %p57 = por %p55, %p56
    %p58 = scmp.ne.s32.totalorder %s47, %s48
    %p59 = scmp.eq.s32.totalorder %s13, 0
    %p60 = por %p58, %p59
    %p61 = scmp.ne.s32.totalorder %s47, %s48
    %p62 = scmp.eq.s32.totalorder %s14, 1
    %p63 = por %p61, %p62
    %p65 = scmp.ne.s32.totalorder %s48, %s64
    %p66 = scmp.eq.s32.totalorder %s14, 0
    %p67 = por %p65, %p66
    %s68 = ssub.s32 %s8, %s15
    %p69 = scmp.eq.s32.totalorder %s68, 0
    %s71 = sadd.s32 %s70, 1
    %s72 = scalar_select %p69, %s70, %s71
    %p75 = pneg %p69
    %p76 = scmp.eq.s32.totalorder %s8, 1
    %p77 = por %p75, %p76
    %p78 = scmp.ne.s32.totalorder %s70, %s73
    %p79 = scmp.eq.s32.totalorder %s8, 0
    %p80 = por %p78, %p79
    %p81 = scmp.ne.s32.totalorder %s70, %s73
    %p82 = scmp.eq.s32.totalorder %s13, 1
    %p83 = por %p81, %p82
    %p84 = scmp.ne.s32.totalorder %s73, %s74
    %p85 = scmp.eq.s32.totalorder %s13, 0
    %p86 = por %p84, %p85
    %p87 = scmp.ne.s32.totalorder %s73, %s74
    %p88 = scmp.eq.s32.totalorder %s14, 1
    %p89 = por %p87, %p88
    %p91 = scmp.ne.s32.totalorder %s74, %s90
    %p92 = scmp.eq.s32.totalorder %s14, 0
    %p93 = por %p91, %p92
    %p94 = scmp.le.s32.totalorder 1, %s8
    %p95 = scmp.lt.s32.totalorder %s8, 3
    %p96 = pnand %p94, %p95
    %p97 = pneg %p96
    // Predicated region
    $region9: #{adapter_bert_forward.15} parent=5 // pred_check
      _
    $region10: #{adapter_bert_forward.15} parent=5 // pred_check_branch
      %99 = sbr.rel (%p96) target = $region12
    $region11: #{adapter_bert_forward.15} parent=5 // pred_region
      %s100 = ssub.s32 %s8, 1
    $region12: #{adapter_bert_forward.15} parent=5 // pred_fallthru
      _
    %p101 = scmp.lt.s32.totalorder %s8, 2
    // Predicated region
    $region13: #{adapter_bert_forward.15} parent=5 // pred_check
      %p102 = pneg %p101
    $region14: #{adapter_bert_forward.15} parent=5 // pred_check_branch
      %104 = sbr.rel (%p102) target = $region16
    $region15: #{adapter_bert_forward.15} parent=5 // pred_region
      // Predicated region
      $region17: #{adapter_bert_forward.15} parent=15 // pred_check
        %p105 = pneg %p28
      $region18: #{adapter_bert_forward.15} parent=15 // pred_check_branch
        %107 = sbr.rel (%p105) target = $region20
      $region19: #{adapter_bert_forward.15} parent=15 // pred_region
        %p108 = scmp.lt.s32.totalorder %s8, 1
        %s109 = scalar_select %p108, %s8, 1
        %s110 = smul.addr %s109, 4
        %s111 = scalar_lea.vmem %s0, %s110
      $region20: #{adapter_bert_forward.15} parent=15 // pred_fallthru
        _
      // Predicated region
      $region21: #{adapter_bert_forward.15} parent=15 // pred_check
        %p112 = pneg %p54
      $region22: #{adapter_bert_forward.15} parent=15 // pred_check_branch
        %114 = sbr.rel (%p112) target = $region24
      $region23: #{adapter_bert_forward.15} parent=15 // pred_region
        %p115 = scmp.lt.s32.totalorder %s8, 1
        %s116 = scalar_select %p115, %s8, 1
        %s117 = scalar_lea.vmem %s1, %s116
      $region24: #{adapter_bert_forward.15} parent=15 // pred_fallthru
        _
    $region16: #{adapter_bert_forward.15} parent=5 // pred_fallthru
      _
    %p118 = scmp.le.s32.totalorder 1, %s8
    %p119 = scmp.lt.s32.totalorder %s8, 3
    %p120 = pnand %p118, %p119
    %p121 = pneg %p120
    // Predicated region
    $region25: #{adapter_bert_forward.15} parent=5 // pred_check
      _
    $region26: #{adapter_bert_forward.15} parent=5 // pred_check_branch
      %123 = sbr.rel (%p120) target = $region28
    $region27: #{adapter_bert_forward.15} parent=5 // pred_region
      %s124 = ssub.s32 %s8, 1
      %p125 = scmp.lt.s32.totalorder %s13, 1
      %s126 = scalar_select %p125, %s13, 1
      %s127 = smul.addr %s126, 4
      %s128 = scalar_lea.vmem %s0, %s127
      %p129 = pneg %p34
      %p130 = pneg %p31
      %p131 = scmp.lt.s32.totalorder %s13, 1
      %s132 = scalar_select %p131, %s13, 1
      %s133 = scalar_lea.vmem %s1, %s132
      %p134 = pneg %p60
      %p135 = pneg %p57
      %p136 = pneg %p86
      %p137 = pneg %p83
      %p138 = scmp.lt.s32.totalorder %s13, 1
      %s139 = scalar_select %p138, %s13, 1
      %s140 = smul.addr %s139, 4
      %s141 = scalar_lea.vmem %s2, %s140
      %p142 = scmp.lt.s32.totalorder %s13, 1
      %s143 = scalar_select %p142, %s13, 1
      %s144 = smul.addr %s143, 4
      %s145 = scalar_lea.vmem %s0, %s144
      %p146 = scmp.lt.s32.totalorder %s13, 1
      %s147 = scalar_select %p146, %s13, 1
      %s148 = scalar_lea.vmem %s1, %s147
      %p149 = scmp.lt.s32.totalorder %s13, 1
      %s150 = scalar_select %p149, %s13, 1
      %s151 = smul.addr %s150, 4
      %s152 = scalar_lea.vmem %s2, %s151
      %v154 = vld [vmem:[%s148] sm:$0x1]
      %v155 = vld [vmem:[%s145] sm:$0xf]
      %v157 = vlaneseq
      %v158 = vshrl.u32 %v157, 7
      %v159 = vsub.s32 0, %v158
      %v160 = vrot.slane %v154, %v159
      %v163 = vunpack.c.l.b16 %v155
      %v164 = vpack.c.b16 %v163, %v163
      %165 = vrot.lane.b32.xlu0 %v164, 96
      %v166 = vpop.permute.xlu0 %165
      %vm167 = vcmask 64512
      %v169 = vsel %vm167, %v155, 0
      %v172 = vsel %vm167, %v166, 0
      %174 = vmatprep.subr.bf16.mxu0 0
      %175 = vmatpush1.bf16.xpose.msra.mxu0 %v172
      %176 = vmatprep.subr.bf16.mxu0 0
      %177 = vmatpush1.bf16.xpose.msra.mxu0 0
      %178 = vmatprep.subr.bf16.mxu0 0
      %179 = vmatpush1.bf16.xpose.msra.mxu0 0
      %180 = vmatprep.subr.bf16.mxu0 0
      %181 = vmatpush1.bf16.xpose.msra.mxu0 0
      %182 = vmatprep.subr.bf16.mxu0 0
      %183 = vmatpush1.bf16.xpose.msra.mxu0 0
      %184 = vmatprep.subr.bf16.mxu0 0
      %185 = vmatpush1.bf16.xpose.msra.mxu0 0
      %186 = vmatprep.subr.bf16.mxu0 0
      %187 = vmatpush1.bf16.xpose.msra.mxu0 0
      %188 = vmatprep.subr.bf16.mxu0 0
      %189 = vmatpush1.bf16.xpose.msra.mxu0 0
      %190 = vmatprep.subr.bf16.mxu0 0
      %191 = vmatpush1.bf16.xpose.msra.mxu0 0
      %192 = vmatprep.subr.bf16.mxu0 0
      %193 = vmatpush1.bf16.xpose.msra.mxu0 0
      %194 = vmatprep.subr.bf16.mxu0 0
      %195 = vmatpush1.bf16.xpose.msra.mxu0 0
      %196 = vmatprep.subr.bf16.mxu0 0
      %197 = vmatpush1.bf16.xpose.msra.mxu0 0
      %198 = vmatprep.subr.bf16.mxu0 0
      %199 = vmatpush1.bf16.xpose.msra.mxu0 0
      %200 = vmatprep.subr.bf16.mxu0 0
      %201 = vmatpush1.bf16.xpose.msra.mxu0 0
      %202 = vmatprep.subr.bf16.mxu0 0
      %203 = vmatpush1.bf16.xpose.msra.mxu0 0
      %204 = vmatprep.subr.bf16.mxu0 0
      %205 = vmatpush1.bf16.xpose.msra.mxu0 0
      %206 = vmatprep.mubr.bf16.mxu0 0
      %207 = vmatmul.mubr.bf16.gmra.mrb[0].mxu0 %v169
      %v208 = vpop.f32.mrb[0].mxu0
      %v209 = vadd.f32 %v160, %v208
      %v210 = vpop.f32.mrb[0].mxu0
      %v211 = vpop.f32.mrb[0].mxu0
      %v212 = vpop.f32.mrb[0].mxu0
      %213 = vdwg.mxu0
      %v214 = vsel %vm167, %v209, -inf
      %215 = vmax.xlane.f32.xlu0 %v214
      %v216 = vpop.xlane.xlu0 %215
      %v217 = vsub.f32 %v209, %v216
      %v218 = vmul.f32 %v217, 1.442695
      %v219 = vpow.pop %v218
      %v220 = vsel %vm167, %v219, 0.0
      %221 = vadd.xlane.f32.xlu0 %v220
      %v222 = vpop.xlane.xlu0 %221
      %v223 = vrcp.pop %v222
      %v224 = vmul.f32 %v219, %v223
      %v225 = vpack.c.bf16 %v224, %v224
      %226 = vrot.lane.b32.xlu0 %v164, 64
      %v227 = vpop.permute.xlu0 %226
      %v229 = vsel %vm167, %v225, 0
      %vm231 = vcmask 1043456
      %v233 = vsel %vm231, %v227, 0
      %235 = vmatprep.subr.bf16.mxu0 0
      %236 = vmatpush1.bf16.msra.mxu0 %v233
      %237 = vmatprep.subr.bf16.mxu0 0
      %238 = vmatpush1.bf16.msra.mxu0 0
      %239 = vmatprep.subr.bf16.mxu0 0
      %240 = vmatpush1.bf16.msra.mxu0 0
      %241 = vmatprep.subr.bf16.mxu0 0
      %242 = vmatpush1.bf16.msra.mxu0 0
      %243 = vmatprep.subr.bf16.mxu0 0
      %244 = vmatpush1.bf16.msra.mxu0 0
      %245 = vmatprep.subr.bf16.mxu0 0
      %246 = vmatpush1.bf16.msra.mxu0 0
      %247 = vmatprep.subr.bf16.mxu0 0
      %248 = vmatpush1.bf16.msra.mxu0 0
      %249 = vmatprep.subr.bf16.mxu0 0
      %250 = vmatpush1.bf16.msra.mxu0 0
      %251 = vmatprep.subr.bf16.mxu0 0
      %252 = vmatpush1.bf16.msra.mxu0 0
      %253 = vmatprep.subr.bf16.mxu0 0
      %254 = vmatpush1.bf16.msra.mxu0 0
      %255 = vmatprep.subr.bf16.mxu0 0
      %256 = vmatpush1.bf16.msra.mxu0 0
      %257 = vmatprep.subr.bf16.mxu0 0
      %258 = vmatpush1.bf16.msra.mxu0 0
      %259 = vmatprep.subr.bf16.mxu0 0
      %260 = vmatpush1.bf16.msra.mxu0 0
      %261 = vmatprep.subr.bf16.mxu0 0
      %262 = vmatpush1.bf16.msra.mxu0 0
      %263 = vmatprep.subr.bf16.mxu0 0
      %264 = vmatpush1.bf16.msra.mxu0 0
      %265 = vmatprep.subr.bf16.mxu0 0
      %266 = vmatpush1.bf16.msra.mxu0 0
      %267 = vmatprep.mubr.bf16.mxu0 0
      %268 = vmatmul.mubr.bf16.gmra.mrb[0].mxu0 %v229
      %v269 = vpop.f32.mrb[0].mxu0
      %v270 = vadd.f32 0.0, %v269
      %v271 = vpop.f32.mrb[0].mxu0
      %v272 = vpop.f32.mrb[0].mxu0
      %v273 = vpop.f32.mrb[0].mxu0
      %274 = vdwg.mxu0
      %v275 = vpack.c.bf16 %v270, %v270
      %vm276 = vcmask 60416
      %277 = vst.msk [vmem:[%s152] sm:$0xf] %vm276, %v275
      %v278 = vld [vmem:[%s145] sm:$0xf]
      %v280 = vunpack.c.l.b16 %v278
      %v281 = vpack.c.b16 %v280, %v280
      %282 = vrot.lane.b32.xlu0 %v281, 120
      %v283 = vpop.permute.xlu0 %282
      %284 = vrot.lane.b32.xlu0 %v281, 88
      %v285 = vpop.permute.xlu0 %284
      %v287 = vsel %vm167, %v283, 0
      %v290 = vsel %vm167, %v285, 0
      %292 = vmatprep.subr.bf16.mxu0 0
      %293 = vmatpush1.bf16.xpose.msra.mxu0 %v290
      %294 = vmatprep.subr.bf16.mxu0 0
      %295 = vmatpush1.bf16.xpose.msra.mxu0 0
      %296 = vmatprep.subr.bf16.mxu0 0
      %297 = vmatpush1.bf16.xpose.msra.mxu0 0
      %298 = vmatprep.subr.bf16.mxu0 0
      %299 = vmatpush1.bf16.xpose.msra.mxu0 0
      %300 = vmatprep.subr.bf16.mxu0 0
      %301 = vmatpush1.bf16.xpose.msra.mxu0 0
      %302 = vmatprep.subr.bf16.mxu0 0
      %303 = vmatpush1.bf16.xpose.msra.mxu0 0
      %304 = vmatprep.subr.bf16.mxu0 0
      %305 = vmatpush1.bf16.xpose.msra.mxu0 0
      %306 = vmatprep.subr.bf16.mxu0 0
      %307 = vmatpush1.bf16.xpose.msra.mxu0 0
      %308 = vmatprep.subr.bf16.mxu0 0
      %309 = vmatpush1.bf16.xpose.msra.mxu0 0
      %310 = vmatprep.subr.bf16.mxu0 0
      %311 = vmatpush1.bf16.xpose.msra.mxu0 0
      %312 = vmatprep.subr.bf16.mxu0 0
      %313 = vmatpush1.bf16.xpose.msra.mxu0 0
      %314 = vmatprep.subr.bf16.mxu0 0
      %315 = vmatpush1.bf16.xpose.msra.mxu0 0
      %316 = vmatprep.subr.bf16.mxu0 0
      %317 = vmatpush1.bf16.xpose.msra.mxu0 0
      %318 = vmatprep.subr.bf16.mxu0 0
      %319 = vmatpush1.bf16.xpose.msra.mxu0 0
      %320 = vmatprep.subr.bf16.mxu0 0
      %321 = vmatpush1.bf16.xpose.msra.mxu0 0
      %322 = vmatprep.subr.bf16.mxu0 0
      %323 = vmatpush1.bf16.xpose.msra.mxu0 0
      %324 = vmatprep.mubr.bf16.mxu0 0
      %325 = vmatmul.mubr.bf16.gmra.mrb[0].mxu0 %v287
      %v326 = vpop.f32.mrb[0].mxu0
      %v327 = vadd.f32 %v160, %v326
      %v328 = vpop.f32.mrb[0].mxu0
      %v329 = vpop.f32.mrb[0].mxu0
      %v330 = vpop.f32.mrb[0].mxu0
      %331 = vdwg.mxu0
      %v332 = vsel %vm167, %v327, -inf
      %333 = vmax.xlane.f32.xlu0 %v332
      %v334 = vpop.xlane.xlu0 %333
      %v335 = vsub.f32 %v327, %v334
      %v336 = vmul.f32 %v335, 1.442695
      %v337 = vpow.pop %v336
      %v338 = vsel %vm167, %v337, 0.0
      %339 = vadd.xlane.f32.xlu0 %v338
      %v340 = vpop.xlane.xlu0 %339
      %v341 = vrcp.pop %v340
      %v342 = vmul.f32 %v337, %v341
      %v343 = vpack.c.bf16 %v342, %v342
      %344 = vrot.lane.b32.xlu0 %v281, 56
      %v345 = vpop.permute.xlu0 %344
      %v347 = vsel %vm167, %v343, 0
      %v350 = vsel %vm231, %v345, 0
      %352 = vmatprep.subr.bf16.mxu0 0
      %353 = vmatpush1.bf16.msra.mxu0 %v350
      %354 = vmatprep.subr.bf16.mxu0 0
      %355 = vmatpush1.bf16.msra.mxu0 0
      %356 = vmatprep.subr.bf16.mxu0 0
      %357 = vmatpush1.bf16.msra.mxu0 0
      %358 = vmatprep.subr.bf16.mxu0 0
      %359 = vmatpush1.bf16.msra.mxu0 0
      %360 = vmatprep.subr.bf16.mxu0 0
      %361 = vmatpush1.bf16.msra.mxu0 0
      %362 = vmatprep.subr.bf16.mxu0 0
      %363 = vmatpush1.bf16.msra.mxu0 0
      %364 = vmatprep.subr.bf16.mxu0 0
      %365 = vmatpush1.bf16.msra.mxu0 0
      %366 = vmatprep.subr.bf16.mxu0 0
      %367 = vmatpush1.bf16.msra.mxu0 0
      %368 = vmatprep.subr.bf16.mxu0 0
      %369 = vmatpush1.bf16.msra.mxu0 0
      %370 = vmatprep.subr.bf16.mxu0 0
      %371 = vmatpush1.bf16.msra.mxu0 0
      %372 = vmatprep.subr.bf16.mxu0 0
      %373 = vmatpush1.bf16.msra.mxu0 0
      %374 = vmatprep.subr.bf16.mxu0 0
      %375 = vmatpush1.bf16.msra.mxu0 0
      %376 = vmatprep.subr.bf16.mxu0 0
      %377 = vmatpush1.bf16.msra.mxu0 0
      %378 = vmatprep.subr.bf16.mxu0 0
      %379 = vmatpush1.bf16.msra.mxu0 0
      %380 = vmatprep.subr.bf16.mxu0 0
      %381 = vmatpush1.bf16.msra.mxu0 0
      %382 = vmatprep.subr.bf16.mxu0 0
      %383 = vmatpush1.bf16.msra.mxu0 0
      %384 = vmatprep.mubr.bf16.mxu0 0
      %385 = vmatmul.mubr.bf16.gmra.mrb[0].mxu0 %v347
      %v386 = vpop.f32.mrb[0].mxu0
      %v387 = vadd.f32 0.0, %v386
      %v388 = vpop.f32.mrb[0].mxu0
      %v389 = vpop.f32.mrb[0].mxu0
      %v390 = vpop.f32.mrb[0].mxu0
      %391 = vdwg.mxu0
      %v392 = vpack.c.bf16 %v387, %v387
      %v394 = vunpack.c.l.b16 %v392
      %v395 = vpack.c.b16 %v394, %v394
      %396 = vrot.lane.b32.xlu0 %v395, 8
      %v397 = vpop.permute.xlu0 %396
      %vm399 = vcmask 126016
      %400 = vst.msk [vmem:[%s152] sm:$0xf] %vm399, %v397
      %v401 = vld [vmem:[%s145] sm:$0xf]
      %v403 = vunpack.c.l.b16 %v401
      %v404 = vpack.c.b16 %v403, %v403
      %405 = vrot.lane.b32.xlu0 %v404, 112
      %v406 = vpop.permute.xlu0 %405
      %407 = vrot.lane.b32.xlu0 %v404, 80
      %v408 = vpop.permute.xlu0 %407
      %v410 = vsel %vm167, %v406, 0
      %v413 = vsel %vm167, %v408, 0
      %415 = vmatprep.subr.bf16.mxu0 0
      %416 = vmatpush1.bf16.xpose.msra.mxu0 %v413
      %417 = vmatprep.subr.bf16.mxu0 0
      %418 = vmatpush1.bf16.xpose.msra.mxu0 0
      %419 = vmatprep.subr.bf16.mxu0 0
      %420 = vmatpush1.bf16.xpose.msra.mxu0 0
      %421 = vmatprep.subr.bf16.mxu0 0
      %422 = vmatpush1.bf16.xpose.msra.mxu0 0
      %423 = vmatprep.subr.bf16.mxu0 0
      %424 = vmatpush1.bf16.xpose.msra.mxu0 0
      %425 = vmatprep.subr.bf16.mxu0 0
      %426 = vmatpush1.bf16.xpose.msra.mxu0 0
      %427 = vmatprep.subr.bf16.mxu0 0
      %428 = vmatpush1.bf16.xpose.msra.mxu0 0
      %429 = vmatprep.subr.bf16.mxu0 0
      %430 = vmatpush1.bf16.xpose.msra.mxu0 0
      %431 = vmatprep.subr.bf16.mxu0 0
      %432 = vmatpush1.bf16.xpose.msra.mxu0 0
      %433 = vmatprep.subr.bf16.mxu0 0
      %434 = vmatpush1.bf16.xpose.msra.mxu0 0
      %435 = vmatprep.subr.bf16.mxu0 0
      %436 = vmatpush1.bf16.xpose.msra.mxu0 0
      %437 = vmatprep.subr.bf16.mxu0 0
      %438 = vmatpush1.bf16.xpose.msra.mxu0 0
      %439 = vmatprep.subr.bf16.mxu0 0
      %440 = vmatpush1.bf16.xpose.msra.mxu0 0
      %441 = vmatprep.subr.bf16.mxu0 0
      %442 = vmatpush1.bf16.xpose.msra.mxu0 0
      %443 = vmatprep.subr.bf16.mxu0 0
      %444 = vmatpush1.bf16.xpose.msra.mxu0 0
      %445 = vmatprep.subr.bf16.mxu0 0
      %446 = vmatpush1.bf16.xpose.msra.mxu0 0
      %447 = vmatprep.mubr.bf16.mxu0 0
      %448 = vmatmul.mubr.bf16.gmra.mrb[0].mxu0 %v410
      %v449 = vpop.f32.mrb[0].mxu0
      %v450 = vadd.f32 %v160, %v449
      %v451 = vpop.f32.mrb[0].mxu0
      %v452 = vpop.f32.mrb[0].mxu0
      %v453 = vpop.f32.mrb[0].mxu0
      %454 = vdwg.mxu0
      %v455 = vsel %vm167, %v450, -inf
      %456 = vmax.xlane.f32.xlu0 %v455
      %v457 = vpop.xlane.xlu0 %456
      %v458 = vsub.f32 %v450, %v457
      %v459 = vmul.f32 %v458, 1.442695
      %v460 = vpow.pop %v459
      %v461 = vsel %vm167, %v460, 0.0
      %462 = vadd.xlane.f32.xlu0 %v461
      %v463 = vpop.xlane.xlu0 %462
      %v464 = vrcp.pop %v463
      %v465 = vmul.f32 %v460, %v464
      %v466 = vpack.c.bf16 %v465, %v465
      %467 = vrot.lane.b32.xlu0 %v404, 48
      %v468 = vpop.permute.xlu0 %467
      %v470 = vsel %vm167, %v466, 0
      %v473 = vsel %vm231, %v468, 0
      %475 = vmatprep.subr.bf16.mxu0 0
      %476 = vmatpush1.bf16.msra.mxu0 %v473
      %477 = vmatprep.subr.bf16.mxu0 0
      %478 = vmatpush1.bf16.msra.mxu0 0
      %479 = vmatprep.subr.bf16.mxu0 0
      %480 = vmatpush1.bf16.msra.mxu0 0
      %481 = vmatprep.subr.bf16.mxu0 0
      %482 = vmatpush1.bf16.msra.mxu0 0
      %483 = vmatprep.subr.bf16.mxu0 0
      %484 = vmatpush1.bf16.msra.mxu0 0
      %485 = vmatprep.subr.bf16.mxu0 0
      %486 = vmatpush1.bf16.msra.mxu0 0
      %487 = vmatprep.subr.bf16.mxu0 0
      %488 = vmatpush1.bf16.msra.mxu0 0
      %489 = vmatprep.subr.bf16.mxu0 0
      %490 = vmatpush1.bf16.msra.mxu0 0
      %491 = vmatprep.subr.bf16.mxu0 0
      %492 = vmatpush1.bf16.msra.mxu0 0
      %493 = vmatprep.subr.bf16.mxu0 0
      %494 = vmatpush1.bf16.msra.mxu0 0
      %495 = vmatprep.subr.bf16.mxu0 0
      %496 = vmatpush1.bf16.msra.mxu0 0
      %497 = vmatprep.subr.bf16.mxu0 0
      %498 = vmatpush1.bf16.msra.mxu0 0
      %499 = vmatprep.subr.bf16.mxu0 0
      %500 = vmatpush1.bf16.msra.mxu0 0
      %501 = vmatprep.subr.bf16.mxu0 0
      %502 = vmatpush1.bf16.msra.mxu0 0
      %503 = vmatprep.subr.bf16.mxu0 0
      %504 = vmatpush1.bf16.msra.mxu0 0
      %505 = vmatprep.subr.bf16.mxu0 0
      %506 = vmatpush1.bf16.msra.mxu0 0
      %507 = vmatprep.mubr.bf16.mxu0 0
      %508 = vmatmul.mubr.bf16.gmra.mrb[0].mxu0 %v470
      %v509 = vpop.f32.mrb[0].mxu0
      %v510 = vadd.f32 0.0, %v509
      %v511 = vpop.f32.mrb[0].mxu0
      %v512 = vpop.f32.mrb[0].mxu0
      %v513 = vpop.f32.mrb[0].mxu0
      %514 = vdwg.mxu0
      %v515 = vpack.c.bf16 %v510, %v510
      %v517 = vunpack.c.l.b16 %v515
      %v518 = vpack.c.b16 %v517, %v517
      %519 = vrot.lane.b32.xlu0 %v518, 16
      %v520 = vpop.permute.xlu0 %519
      %vm522 = vcmask 191616
      %523 = vst.msk [vmem:[%s152] sm:$0xf] %vm522, %v520
      %v524 = vld [vmem:[%s145] sm:$0xf]
      %v526 = vunpack.c.l.b16 %v524
      %v527 = vpack.c.b16 %v526, %v526
      %528 = vrot.lane.b32.xlu0 %v527, 104
      %v529 = vpop.permute.xlu0 %528
      %530 = vrot.lane.b32.xlu0 %v527, 72
      %v531 = vpop.permute.xlu0 %530
      %v533 = vsel %vm167, %v529, 0
      %v536 = vsel %vm167, %v531, 0
      %538 = vmatprep.subr.bf16.mxu0 0
      %539 = vmatpush1.bf16.xpose.msra.mxu0 %v536
      %540 = vmatprep.subr.bf16.mxu0 0
      %541 = vmatpush1.bf16.xpose.msra.mxu0 0
      %542 = vmatprep.subr.bf16.mxu0 0
      %543 = vmatpush1.bf16.xpose.msra.mxu0 0
      %544 = vmatprep.subr.bf16.mxu0 0
      %545 = vmatpush1.bf16.xpose.msra.mxu0 0
      %546 = vmatprep.subr.bf16.mxu0 0
      %547 = vmatpush1.bf16.xpose.msra.mxu0 0
      %548 = vmatprep.subr.bf16.mxu0 0
      %549 = vmatpush1.bf16.xpose.msra.mxu0 0
      %550 = vmatprep.subr.bf16.mxu0 0
      %551 = vmatpush1.bf16.xpose.msra.mxu0 0
      %552 = vmatprep.subr.bf16.mxu0 0
      %553 = vmatpush1.bf16.xpose.msra.mxu0 0
      %554 = vmatprep.subr.bf16.mxu0 0
      %555 = vmatpush1.bf16.xpose.msra.mxu0 0
      %556 = vmatprep.subr.bf16.mxu0 0
      %557 = vmatpush1.bf16.xpose.msra.mxu0 0
      %558 = vmatprep.subr.bf16.mxu0 0
      %559 = vmatpush1.bf16.xpose.msra.mxu0 0
      %560 = vmatprep.subr.bf16.mxu0 0
      %561 = vmatpush1.bf16.xpose.msra.mxu0 0
      %562 = vmatprep.subr.bf16.mxu0 0
      %563 = vmatpush1.bf16.xpose.msra.mxu0 0
      %564 = vmatprep.subr.bf16.mxu0 0
      %565 = vmatpush1.bf16.xpose.msra.mxu0 0
      %566 = vmatprep.subr.bf16.mxu0 0
      %567 = vmatpush1.bf16.xpose.msra.mxu0 0
      %568 = vmatprep.subr.bf16.mxu0 0
      %569 = vmatpush1.bf16.xpose.msra.mxu0 0
      %570 = vmatprep.mubr.bf16.mxu0 0
      %571 = vmatmul.mubr.bf16.gmra.mrb[0].mxu0 %v533
      %v572 = vpop.f32.mrb[0].mxu0
      %v573 = vadd.f32 %v160, %v572
      %v574 = vpop.f32.mrb[0].mxu0
      %v575 = vpop.f32.mrb[0].mxu0
      %v576 = vpop.f32.mrb[0].mxu0
      %577 = vdwg.mxu0
      %v578 = vsel %vm167, %v573, -inf
      %579 = vmax.xlane.f32.xlu0 %v578
      %v580 = vpop.xlane.xlu0 %579
      %v581 = vsub.f32 %v573, %v580
      %v582 = vmul.f32 %v581, 1.442695
      %v583 = vpow.pop %v582
      %v584 = vsel %vm167, %v583, 0.0
      %585 = vadd.xlane.f32.xlu0 %v584
      %v586 = vpop.xlane.xlu0 %585
      %v587 = vrcp.pop %v586
      %v588 = vmul.f32 %v583, %v587
      %v589 = vpack.c.bf16 %v588, %v588
      %590 = vrot.lane.b32.xlu0 %v527, 40
      %v591 = vpop.permute.xlu0 %590
      %v593 = vsel %vm167, %v589, 0
      %v596 = vsel %vm231, %v591, 0
      %598 = vmatprep.subr.bf16.mxu0 0
      %599 = vmatpush1.bf16.msra.mxu0 %v596
      %600 = vmatprep.subr.bf16.mxu0 0
      %601 = vmatpush1.bf16.msra.mxu0 0
      %602 = vmatprep.subr.bf16.mxu0 0
      %603 = vmatpush1.bf16.msra.mxu0 0
      %604 = vmatprep.subr.bf16.mxu0 0
      %605 = vmatpush1.bf16.msra.mxu0 0
      %606 = vmatprep.subr.bf16.mxu0 0
      %607 = vmatpush1.bf16.msra.mxu0 0
      %608 = vmatprep.subr.bf16.mxu0 0
      %609 = vmatpush1.bf16.msra.mxu0 0
      %610 = vmatprep.subr.bf16.mxu0 0
      %611 = vmatpush1.bf16.msra.mxu0 0
      %612 = vmatprep.subr.bf16.mxu0 0
      %613 = vmatpush1.bf16.msra.mxu0 0
      %614 = vmatprep.subr.bf16.mxu0 0
      %615 = vmatpush1.bf16.msra.mxu0 0
      %616 = vmatprep.subr.bf16.mxu0 0
      %617 = vmatpush1.bf16.msra.mxu0 0
      %618 = vmatprep.subr.bf16.mxu0 0
      %619 = vmatpush1.bf16.msra.mxu0 0
      %620 = vmatprep.subr.bf16.mxu0 0
      %621 = vmatpush1.bf16.msra.mxu0 0
      %622 = vmatprep.subr.bf16.mxu0 0
      %623 = vmatpush1.bf16.msra.mxu0 0
      %624 = vmatprep.subr.bf16.mxu0 0
      %625 = vmatpush1.bf16.msra.mxu0 0
      %626 = vmatprep.subr.bf16.mxu0 0
      %627 = vmatpush1.bf16.msra.mxu0 0
      %628 = vmatprep.subr.bf16.mxu0 0
      %629 = vmatpush1.bf16.msra.mxu0 0
      %630 = vmatprep.mubr.bf16.mxu0 0
      %631 = vmatmul.mubr.bf16.gmra.mrb[0].mxu0 %v593
      %v632 = vpop.f32.mrb[0].mxu0
      %v633 = vadd.f32 0.0, %v632
      %v634 = vpop.f32.mrb[0].mxu0
      %v635 = vpop.f32.mrb[0].mxu0
      %v636 = vpop.f32.mrb[0].mxu0
      %637 = vdwg.mxu0
      %v638 = vpack.c.bf16 %v633, %v633
      %v640 = vunpack.c.l.b16 %v638
      %v641 = vpack.c.b16 %v640, %v640
      %642 = vrot.lane.b32.xlu0 %v641, 24
      %v643 = vpop.permute.xlu0 %642
      %vm645 = vcmask 257216
      %646 = vst.msk [vmem:[%s152] sm:$0xf] %vm645, %v643
      %p647 = scmp.lt.s32.totalorder %s13, 1
      %s648 = scalar_select %p647, %s13, 1
      %s649 = smul.addr %s648, 4
      %s650 = scalar_lea.vmem %s2, %s649
      // Predicated region
      $region29: #{adapter_bert_forward.15} parent=27 // pred_check
        %p651 = pneg %p83
      $region30: #{adapter_bert_forward.15} parent=27 // pred_check_branch
        %653 = sbr.rel (%p651) target = $region32
      $region31: #{adapter_bert_forward.15} parent=27 // pred_region
        _
      $region32: #{adapter_bert_forward.15} parent=27 // pred_fallthru
        _
    $region28: #{adapter_bert_forward.15} parent=5 // pred_fallthru
      _
    %p654 = scmp.le.s32.totalorder 2, %s8
    // Predicated region
    $region33: #{adapter_bert_forward.15} parent=5 // pred_check
      %p655 = pneg %p654
    $region34: #{adapter_bert_forward.15} parent=5 // pred_check_branch
      %657 = sbr.rel (%p655) target = $region36
    $region35: #{adapter_bert_forward.15} parent=5 // pred_region
      %s658 = ssub.s32 %s8, 2
      // Predicated region
      $region37: #{adapter_bert_forward.15} parent=35 // pred_check
        %p659 = pneg %p89
      $region38: #{adapter_bert_forward.15} parent=35 // pred_check_branch
        %661 = sbr.rel (%p659) target = $region40
      $region39: #{adapter_bert_forward.15} parent=35 // pred_region
        %p662 = scmp.lt.s32.totalorder %s14, 1
        %s663 = scalar_select %p662, %s14, 1
        %s664 = smul.addr %s663, 4
        %s665 = scalar_lea.vmem %s2, %s664
      $region40: #{adapter_bert_forward.15} parent=35 // pred_fallthru
        _
    $region36: #{adapter_bert_forward.15} parent=5 // pred_fallthru
      _
  $region6: #{adapter_bert_forward.15} parent=0 // loop_footer
    %s12 = sadd.s32 1, %s8
  $region7: #{adapter_bert_forward.15} parent=0 // loop_footer_branch
    %7 = sbr.rel target = $region3
  $region8: #{adapter_bert_forward.15} parent=0 // loop_exit
    _

// kernel: adapter_bert_forward.18
$region0: #{adapter_bert_forward.18}
  #allocation0 [shape = 'u32[]', space=smem, size = 0x4, offset = 0x4, fixed_abs, tag = 'smem constant byte address 0x4 - core index']
  #allocation1 [shape = 'u32[144,128]{1,0:T(1,128)}', space=vmem, size = 0x12000, scoped, tag = 'internal scratch']
  #allocation2 [shape = 'f32[16,32]{1,0:T(8,128)}', space=vmem, size = 0x2000, scoped, tag = 'scratch operand']
  %s0 = inlined_call_operand.vmem [shape: bf16[16,64], index: 0, kind: input, shape index: {}]
  %s1 = inlined_call_operand.vmem [shape: bf16[64,32], index: 1, kind: input, shape index: {}]
  %s2 = inlined_call_operand.vmem [shape: f32[1,32], index: 2, kind: input, shape index: {}]
  %s3 = inlined_call_operand.vmem [shape: bf16[16,32], index: 3, kind: output, shape index: {}]
  %s4 = sld [smem:[#allocation0]]
  $region30: #{adapter_bert_forward.18} parent=0
    _
  %s6 = ssub.s32 1, %s4
  %s7 = scalar_select 0, %s6, %s4
  // Predicated region
  $region2: #{adapter_bert_forward.18} parent=0 // pred_check
    _
  $region3: #{adapter_bert_forward.18} parent=0 // pred_check_branch
    %9 = sbr.rel (0) target = $region5
  $region4: #{adapter_bert_forward.18} parent=0 // pred_region
    _
  $region5: #{adapter_bert_forward.18} parent=0 // pred_fallthru
    _
  // Predicated region
  $region6: #{adapter_bert_forward.18} parent=0 // pred_check
    _
  $region7: #{adapter_bert_forward.18} parent=0 // pred_check_branch
    %11 = sbr.rel (0) target = $region9
  $region8: #{adapter_bert_forward.18} parent=0 // pred_region
    _
  $region9: #{adapter_bert_forward.18} parent=0 // pred_fallthru
    _
  // Predicated region
  $region10: #{adapter_bert_forward.18} parent=0 // pred_check
    _
  $region11: #{adapter_bert_forward.18} parent=0 // pred_check_branch
    %13 = sbr.rel (0) target = $region13
  $region12: #{adapter_bert_forward.18} parent=0 // pred_region
    _
  $region13: #{adapter_bert_forward.18} parent=0 // pred_fallthru
    _
  %p15 = scmp.eq.s32.totalorder 0, 0
  // Predicated region
  $region14: #{adapter_bert_forward.18} parent=0 // pred_check
    %p16 = pneg %p15
  $region15: #{adapter_bert_forward.18} parent=0 // pred_check_branch
    %18 = sbr.rel (%p16) target = $region17
  $region16: #{adapter_bert_forward.18} parent=0 // pred_region
    %vm19 = vcmask 261120
    %20 = vst.msk [vmem:[#allocation2] sm:$0xff] %vm19, 0.0
    %21 = vst.msk [vmem:[#allocation2 + $0x8] sm:$0xff] %vm19, 0.0
  $region17: #{adapter_bert_forward.18} parent=0 // pred_fallthru
    _
  %v22 = vld [vmem:[#allocation2] sm:$0xff]
  %v23 = vld [vmem:[#allocation2 + $0x8] sm:$0xff]
  %v24 = vld [vmem:[%s0] sm:$0xf]
  %v25 = vld [vmem:[%s0 + $0x4] sm:$0xf]
  %v26 = vld [vmem:[%s1] sm:$0xf]
  %v27 = vld [vmem:[%s1 + $0x4] sm:$0xf]
  %v28 = vld [vmem:[%s1 + $0x8] sm:$0xf]
  %v29 = vld [vmem:[%s1 + $0xc] sm:$0xf]
  %v30 = vld [vmem:[%s1 + $0x10] sm:$0xf]
  %v31 = vld [vmem:[%s1 + $0x14] sm:$0xf]
  %v32 = vld [vmem:[%s1 + $0x18] sm:$0xf]
  %v33 = vld [vmem:[%s1 + $0x1c] sm:$0xf]
  %v36 = vunpack.c.l.b16 %v24
  %v37 = vunpack.c.l.b16 %v25
  %v38 = vpack.c.b16 %v37, %v36
  %v47 = vunpack.c.l.b16 %v26
  %v48 = vunpack.c.l.b16 %v27
  %v49 = vunpack.c.l.b16 %v28
  %v50 = vunpack.c.l.b16 %v29
  %v51 = vunpack.c.l.b16 %v30
  %v52 = vunpack.c.l.b16 %v31
  %v53 = vunpack.c.l.b16 %v32
  %v54 = vunpack.c.l.b16 %v33
  %v55 = vpack.c.b16 %v48, %v47
  %v56 = vpack.c.b16 %v50, %v49
  %v57 = vpack.c.b16 %v52, %v51
  %v58 = vpack.c.b16 %v54, %v53
  %vm63 = vcmask 523264
  %v65 = vsel %vm63, %v38, 0
  %67 = vmatprep.subr.bf16.mxu0 0
  %68 = vmatpush1.bf16.msra.mxu0 %v55
  %69 = vmatprep.subr.bf16.mxu0 0
  %70 = vmatpush1.bf16.msra.mxu0 %v56
  %71 = vmatprep.subr.bf16.mxu0 0
  %72 = vmatpush1.bf16.msra.mxu0 %v57
  %73 = vmatprep.subr.bf16.mxu0 0
  %74 = vmatpush1.bf16.msra.mxu0 %v58
  %75 = vmatprep.subr.bf16.mxu0 0
  %76 = vmatpush1.bf16.msra.mxu0 0
  %77 = vmatprep.subr.bf16.mxu0 0
  %78 = vmatpush1.bf16.msra.mxu0 0
  %79 = vmatprep.subr.bf16.mxu0 0
  %80 = vmatpush1.bf16.msra.mxu0 0
  %81 = vmatprep.subr.bf16.mxu0 0
  %82 = vmatpush1.bf16.msra.mxu0 0
  %83 = vmatprep.subr.bf16.mxu0 0
  %84 = vmatpush1.bf16.msra.mxu0 0
  %85 = vmatprep.subr.bf16.mxu0 0
  %86 = vmatpush1.bf16.msra.mxu0 0
  %87 = vmatprep.subr.bf16.mxu0 0
  %88 = vmatpush1.bf16.msra.mxu0 0
  %89 = vmatprep.subr.bf16.mxu0 0
  %90 = vmatpush1.bf16.msra.mxu0 0
  %91 = vmatprep.subr.bf16.mxu0 0
  %92 = vmatpush1.bf16.msra.mxu0 0
  %93 = vmatprep.subr.bf16.mxu0 0
  %94 = vmatpush1.bf16.msra.mxu0 0
  %95 = vmatprep.subr.bf16.mxu0 0
  %96 = vmatpush1.bf16.msra.mxu0 0
  %97 = vmatprep.subr.bf16.mxu0 0
  %98 = vmatpush1.bf16.msra.mxu0 0
  %99 = vmatprep.mubr.bf16.mxu0 0
  %100 = vmatmul.mubr.bf16.gmra.mrb[0].mxu0 %v65
  %v101 = vpop.f32.mrb[0].mxu0
  %v102 = vadd.f32 0.0, %v101
  %v103 = vpop.f32.mrb[0].mxu0
  %v104 = vpop.f32.mrb[0].mxu0
  %v105 = vadd.f32 0.0, %v104
  %v106 = vpop.f32.mrb[0].mxu0
  %107 = vdwg.mxu0
  %v108 = vadd.f32 %v22, %v102
  %v109 = vadd.f32 %v23, %v105
  %vm110 = vcmask 261120
  %111 = vst.msk [vmem:[#allocation2] sm:$0xff] %vm110, %v108
  %112 = vst.msk [vmem:[#allocation2 + $0x8] sm:$0xff] %vm110, %v109
  // Predicated region
  $region18: #{adapter_bert_forward.18} parent=0 // pred_check
    %p113 = pneg %p15
  $region19: #{adapter_bert_forward.18} parent=0 // pred_check_branch
    %115 = sbr.rel (%p113) target = $region21
  $region20: #{adapter_bert_forward.18} parent=0 // pred_region
    %v116 = vld [vmem:[#allocation2] sm:$0xff]
    %v117 = vld [vmem:[#allocation2 + $0x8] sm:$0xff]
    %v118 = vld [vmem:[%s2] sm:$0x1]
    %v120 = vlaneseq
    %v121 = vshrl.u32 %v120, 7
    %v122 = vsub.s32 0, %v121
    %v123 = vrot.slane %v118, %v122
    %v125 = vadd.f32 %v116, %v123
    %v126 = vadd.f32 %v117, %v123
    %v127 = vpack.c.bf16 %v126, %v125
    %v129 = vunpack.c.l.b16 %v127
    %v130 = vunpack.c.h.b16 %v127
    %v131 = vpack.c.b16 %v129, %v129
    %v132 = vpack.c.b16 %v130, %v130
    %vm135 = vcmask 257024
    %136 = vst.msk [vmem:[%s3] sm:$0xf] %vm135, %v131
    %137 = vst.msk [vmem:[%s3 + $0x4] sm:$0xf] %vm135, %v132
  $region21: #{adapter_bert_forward.18} parent=0 // pred_fallthru
    _
  // Predicated region
  $region22: #{adapter_bert_forward.18} parent=0 // pred_check
    _
  $region23: #{adapter_bert_forward.18} parent=0 // pred_check_branch
    %139 = sbr.rel (0) target = $region25
  $region24: #{adapter_bert_forward.18} parent=0 // pred_region
    _
  $region25: #{adapter_bert_forward.18} parent=0 // pred_fallthru
    _
  // Predicated region
  $region26: #{adapter_bert_forward.18} parent=0 // pred_check
    _
  $region27: #{adapter_bert_forward.18} parent=0 // pred_check_branch
    %141 = sbr.rel (0) target = $region29
  $region28: #{adapter_bert_forward.18} parent=0 // pred_region
    _
  $region29: #{adapter_bert_forward.18} parent=0 // pred_fallthru
    _

// kernel: adapter_bert_forward.17
$region0: #{adapter_bert_forward.17}
  #allocation0 [shape = 'u32[]', space=smem, size = 0x4, offset = 0x4, fixed_abs, tag = 'smem constant byte address 0x4 - core index']
  #allocation1 [shape = 'u32[144,128]{1,0:T(1,128)}', space=vmem, size = 0x12000, scoped, tag = 'internal scratch']
  #allocation2 [shape = 'f32[16,64]{1,0:T(8,128)}', space=vmem, size = 0x2000, scoped, tag = 'scratch operand']
  %s0 = inlined_call_operand.vmem [shape: bf16[16,32], index: 0, kind: input, shape index: {}]
  %s1 = inlined_call_operand.vmem [shape: bf16[32,64], index: 1, kind: input, shape index: {}]
  %s2 = inlined_call_operand.vmem [shape: f32[1,64], index: 2, kind: input, shape index: {}]
  %s3 = inlined_call_operand.vmem [shape: bf16[16,64], index: 3, kind: output, shape index: {}]
  %s4 = sld [smem:[#allocation0]]
  $region30: #{adapter_bert_forward.17} parent=0
    _
  %s6 = ssub.s32 1, %s4
  %s7 = scalar_select 0, %s6, %s4
  // Predicated region
  $region2: #{adapter_bert_forward.17} parent=0 // pred_check
    _
  $region3: #{adapter_bert_forward.17} parent=0 // pred_check_branch
    %9 = sbr.rel (0) target = $region5
  $region4: #{adapter_bert_forward.17} parent=0 // pred_region
    _
  $region5: #{adapter_bert_forward.17} parent=0 // pred_fallthru
    _
  // Predicated region
  $region6: #{adapter_bert_forward.17} parent=0 // pred_check
    _
  $region7: #{adapter_bert_forward.17} parent=0 // pred_check_branch
    %11 = sbr.rel (0) target = $region9
  $region8: #{adapter_bert_forward.17} parent=0 // pred_region
    _
  $region9: #{adapter_bert_forward.17} parent=0 // pred_fallthru
    _
  // Predicated region
  $region10: #{adapter_bert_forward.17} parent=0 // pred_check
    _
  $region11: #{adapter_bert_forward.17} parent=0 // pred_check_branch
    %13 = sbr.rel (0) target = $region13
  $region12: #{adapter_bert_forward.17} parent=0 // pred_region
    _
  $region13: #{adapter_bert_forward.17} parent=0 // pred_fallthru
    _
  %p15 = scmp.eq.s32.totalorder 0, 0
  // Predicated region
  $region14: #{adapter_bert_forward.17} parent=0 // pred_check
    %p16 = pneg %p15
  $region15: #{adapter_bert_forward.17} parent=0 // pred_check_branch
    %18 = sbr.rel (%p16) target = $region17
  $region16: #{adapter_bert_forward.17} parent=0 // pred_region
    %vm19 = vcmask 523264
    %20 = vst.msk [vmem:[#allocation2] sm:$0xff] %vm19, 0.0
    %21 = vst.msk [vmem:[#allocation2 + $0x8] sm:$0xff] %vm19, 0.0
  $region17: #{adapter_bert_forward.17} parent=0 // pred_fallthru
    _
  %v22 = vld [vmem:[#allocation2] sm:$0xff]
  %v23 = vld [vmem:[#allocation2 + $0x8] sm:$0xff]
  %v24 = vld [vmem:[%s0] sm:$0xf]
  %v25 = vld [vmem:[%s0 + $0x4] sm:$0xf]
  %v26 = vld [vmem:[%s1] sm:$0xf]
  %v27 = vld [vmem:[%s1 + $0x4] sm:$0xf]
  %v28 = vld [vmem:[%s1 + $0x8] sm:$0xf]
  %v29 = vld [vmem:[%s1 + $0xc] sm:$0xf]
  %v32 = vunpack.c.l.b16 %v24
  %v33 = vunpack.c.l.b16 %v25
  %v34 = vpack.c.b16 %v33, %v32
  %v39 = vunpack.c.l.b16 %v26
  %v40 = vunpack.c.l.b16 %v27
  %v41 = vunpack.c.l.b16 %v28
  %v42 = vunpack.c.l.b16 %v29
  %v43 = vpack.c.b16 %v40, %v39
  %v44 = vpack.c.b16 %v42, %v41
  %vm47 = vcmask 261120
  %v49 = vsel %vm47, %v34, 0
  %51 = vmatprep.subr.bf16.mxu0 0
  %52 = vmatpush1.bf16.msra.mxu0 %v43
  %53 = vmatprep.subr.bf16.mxu0 0
  %54 = vmatpush1.bf16.msra.mxu0 %v44
  %55 = vmatprep.subr.bf16.mxu0 0
  %56 = vmatpush1.bf16.msra.mxu0 0
  %57 = vmatprep.subr.bf16.mxu0 0
  %58 = vmatpush1.bf16.msra.mxu0 0
  %59 = vmatprep.subr.bf16.mxu0 0
  %60 = vmatpush1.bf16.msra.mxu0 0
  %61 = vmatprep.subr.bf16.mxu0 0
  %62 = vmatpush1.bf16.msra.mxu0 0
  %63 = vmatprep.subr.bf16.mxu0 0
  %64 = vmatpush1.bf16.msra.mxu0 0
  %65 = vmatprep.subr.bf16.mxu0 0
  %66 = vmatpush1.bf16.msra.mxu0 0
  %67 = vmatprep.subr.bf16.mxu0 0
  %68 = vmatpush1.bf16.msra.mxu0 0
  %69 = vmatprep.subr.bf16.mxu0 0
  %70 = vmatpush1.bf16.msra.mxu0 0
  %71 = vmatprep.subr.bf16.mxu0 0
  %72 = vmatpush1.bf16.msra.mxu0 0
  %73 = vmatprep.subr.bf16.mxu0 0
  %74 = vmatpush1.bf16.msra.mxu0 0
  %75 = vmatprep.subr.bf16.mxu0 0
  %76 = vmatpush1.bf16.msra.mxu0 0
  %77 = vmatprep.subr.bf16.mxu0 0
  %78 = vmatpush1.bf16.msra.mxu0 0
  %79 = vmatprep.subr.bf16.mxu0 0
  %80 = vmatpush1.bf16.msra.mxu0 0
  %81 = vmatprep.subr.bf16.mxu0 0
  %82 = vmatpush1.bf16.msra.mxu0 0
  %83 = vmatprep.mubr.bf16.mxu0 0
  %84 = vmatmul.mubr.bf16.gmra.mrb[0].mxu0 %v49
  %v85 = vpop.f32.mrb[0].mxu0
  %v86 = vadd.f32 0.0, %v85
  %v87 = vpop.f32.mrb[0].mxu0
  %v88 = vpop.f32.mrb[0].mxu0
  %v89 = vadd.f32 0.0, %v88
  %v90 = vpop.f32.mrb[0].mxu0
  %91 = vdwg.mxu0
  %v92 = vadd.f32 %v22, %v86
  %v93 = vadd.f32 %v23, %v89
  %vm94 = vcmask 523264
  %95 = vst.msk [vmem:[#allocation2] sm:$0xff] %vm94, %v92
  %96 = vst.msk [vmem:[#allocation2 + $0x8] sm:$0xff] %vm94, %v93
  // Predicated region
  $region18: #{adapter_bert_forward.17} parent=0 // pred_check
    %p97 = pneg %p15
  $region19: #{adapter_bert_forward.17} parent=0 // pred_check_branch
    %99 = sbr.rel (%p97) target = $region21
  $region20: #{adapter_bert_forward.17} parent=0 // pred_region
    %v100 = vld [vmem:[#allocation2] sm:$0xff]
    %v101 = vld [vmem:[#allocation2 + $0x8] sm:$0xff]
    %v102 = vld [vmem:[%s2] sm:$0x1]
    %v104 = vlaneseq
    %v105 = vshrl.u32 %v104, 7
    %v106 = vsub.s32 0, %v105
    %v107 = vrot.slane %v102, %v106
    %v109 = vadd.f32 %v100, %v107
    %v110 = vadd.f32 %v101, %v107
    %v111 = vmul.f32 %v109, 0.5
    %v112 = vmul.f32 %v110, 0.5
    %v113 = vmul.f32 %v109, 0.044715
    %v114 = vmul.f32 %v110, 0.044715
    %v115 = vmul.f32 %v113, %v109
    %v116 = vmul.f32 %v114, %v110
    %v117 = vmul.f32 %v115, %v109
    %v118 = vmul.f32 %v116, %v110
    %v119 = vadd.f32 %v109, %v117
    %v120 = vadd.f32 %v110, %v118
    %v121 = vmul.f32 %v119, 0.7978846
    %v122 = vmul.f32 %v120, 0.7978846
    %v123 = vtanh.pop %v121
    %v124 = vtanh.pop %v122
    %v125 = vadd.f32 %v123, 1.0
    %v126 = vadd.f32 %v124, 1.0
    %v127 = vmul.f32 %v111, %v125
    %v128 = vmul.f32 %v112, %v126
    %v129 = vpack.c.bf16 %v128, %v127
    %v131 = vunpack.c.l.b16 %v129
    %v132 = vunpack.c.h.b16 %v129
    %v133 = vpack.c.b16 %v131, %v131
    %v134 = vpack.c.b16 %v132, %v132
    %vm137 = vcmask 519168
    %138 = vst.msk [vmem:[%s3] sm:$0xf] %vm137, %v133
    %139 = vst.msk [vmem:[%s3 + $0x4] sm:$0xf] %vm137, %v134
  $region21: #{adapter_bert_forward.17} parent=0 // pred_fallthru
    _
  // Predicated region
  $region22: #{adapter_bert_forward.17} parent=0 // pred_check
    _
  $region23: #{adapter_bert_forward.17} parent=0 // pred_check_branch
    %141 = sbr.rel (0) target = $region25
  $region24: #{adapter_bert_forward.17} parent=0 // pred_region
    _
  $region25: #{adapter_bert_forward.17} parent=0 // pred_fallthru
    _
  // Predicated region
  $region26: #{adapter_bert_forward.17} parent=0 // pred_check
    _
  $region27: #{adapter_bert_forward.17} parent=0 // pred_check_branch
    %143 = sbr.rel (0) target = $region29
  $region28: #{adapter_bert_forward.17} parent=0 // pred_region
    _
  $region29: #{adapter_bert_forward.17} parent=0 // pred_fallthru
    _

// kernel: adapter_bert_forward.19
$region0: #{adapter_bert_forward.19}
  #allocation0 [shape = 'u32[]', space=smem, size = 0x4, offset = 0x4, fixed_abs, tag = 'smem constant byte address 0x4 - core index']
  #allocation1 [shape = 'u32[144,128]{1,0:T(1,128)}', space=vmem, size = 0x12000, scoped, tag = 'internal scratch']
  %s0 = inlined_call_operand.vmem [shape: bf16[16,32], index: 0, kind: input, shape index: {}]
  %s1 = inlined_call_operand.vmem [shape: bf16[16,32], index: 1, kind: input, shape index: {}]
  %s2 = inlined_call_operand.vmem [shape: bf16[32,16], index: 2, kind: input, shape index: {}]
  %s3 = inlined_call_operand.vmem [shape: f32[1,16], index: 3, kind: input, shape index: {}]
  %s4 = inlined_call_operand.vmem [shape: bf16[16,32], index: 4, kind: input, shape index: {}]
  %s5 = inlined_call_operand.vmem [shape: f32[1,32], index: 5, kind: input, shape index: {}]
  %s6 = inlined_call_operand.vmem [shape: f32[1,32], index: 6, kind: input, shape index: {}]
  %s7 = inlined_call_operand.vmem [shape: f32[1,32], index: 7, kind: input, shape index: {}]
  %s8 = inlined_call_operand.vmem [shape: bf16[16,32], index: 8, kind: output, shape index: {}]
  %s9 = sld [smem:[#allocation0]]
  $region42: #{adapter_bert_forward.19} parent=0
    _
  %s11 = ssub.s32 1, %s9
  %s12 = scalar_select 0, %s11, %s9
  // Predicated region
  $region2: #{adapter_bert_forward.19} parent=0 // pred_check
    _
  $region3: #{adapter_bert_forward.19} parent=0 // pred_check_branch
    %14 = sbr.rel (0) target = $region5
  $region4: #{adapter_bert_forward.19} parent=0 // pred_region
    _
  $region5: #{adapter_bert_forward.19} parent=0 // pred_fallthru
    _
  // Predicated region
  $region6: #{adapter_bert_forward.19} parent=0 // pred_check
    _
  $region7: #{adapter_bert_forward.19} parent=0 // pred_check_branch
    %16 = sbr.rel (0) target = $region9
  $region8: #{adapter_bert_forward.19} parent=0 // pred_region
    _
  $region9: #{adapter_bert_forward.19} parent=0 // pred_fallthru
    _
  // Predicated region
  $region10: #{adapter_bert_forward.19} parent=0 // pred_check
    _
  $region11: #{adapter_bert_forward.19} parent=0 // pred_check_branch
    %18 = sbr.rel (0) target = $region13
  $region12: #{adapter_bert_forward.19} parent=0 // pred_region
    _
  $region13: #{adapter_bert_forward.19} parent=0 // pred_fallthru
    _
  // Predicated region
  $region14: #{adapter_bert_forward.19} parent=0 // pred_check
    _
  $region15: #{adapter_bert_forward.19} parent=0 // pred_check_branch
    %20 = sbr.rel (0) target = $region17
  $region16: #{adapter_bert_forward.19} parent=0 // pred_region
    _
  $region17: #{adapter_bert_forward.19} parent=0 // pred_fallthru
    _
  // Predicated region
  $region18: #{adapter_bert_forward.19} parent=0 // pred_check
    _
  $region19: #{adapter_bert_forward.19} parent=0 // pred_check_branch
    %22 = sbr.rel (0) target = $region21
  $region20: #{adapter_bert_forward.19} parent=0 // pred_region
    _
  $region21: #{adapter_bert_forward.19} parent=0 // pred_fallthru
    _
  // Predicated region
  $region22: #{adapter_bert_forward.19} parent=0 // pred_check
    _
  $region23: #{adapter_bert_forward.19} parent=0 // pred_check_branch
    %24 = sbr.rel (0) target = $region25
  $region24: #{adapter_bert_forward.19} parent=0 // pred_region
    _
  $region25: #{adapter_bert_forward.19} parent=0 // pred_fallthru
    _
  // Predicated region
  $region26: #{adapter_bert_forward.19} parent=0 // pred_check
    _
  $region27: #{adapter_bert_forward.19} parent=0 // pred_check_branch
    %26 = sbr.rel (0) target = $region29
  $region28: #{adapter_bert_forward.19} parent=0 // pred_region
    _
  $region29: #{adapter_bert_forward.19} parent=0 // pred_fallthru
    _
  // Predicated region
  $region30: #{adapter_bert_forward.19} parent=0 // pred_check
    _
  $region31: #{adapter_bert_forward.19} parent=0 // pred_check_branch
    %28 = sbr.rel (0) target = $region33
  $region32: #{adapter_bert_forward.19} parent=0 // pred_region
    _
  $region33: #{adapter_bert_forward.19} parent=0 // pred_fallthru
    _
  %v30 = vld [vmem:[%s0] sm:$0xf]
  %v31 = vld [vmem:[%s0 + $0x4] sm:$0xf]
  %v32 = vld [vmem:[%s2] sm:$0xf]
  %v33 = vld [vmem:[%s2 + $0x4] sm:$0xf]
  %v34 = vld [vmem:[%s2 + $0x8] sm:$0xf]
  %v35 = vld [vmem:[%s2 + $0xc] sm:$0xf]
  %v36 = vld [vmem:[%s3] sm:$0x1]
  %v38 = vlaneseq
  %v39 = vshrl.u32 %v38, 7
  %v40 = vsub.s32 0, %v39
  %v41 = vrot.slane %v36, %v40
  %v45 = vunpack.c.l.b16 %v30
  %v46 = vunpack.c.l.b16 %v31
  %v47 = vpack.c.b16 %v46, %v45
  %v52 = vunpack.c.l.b16 %v32
  %v53 = vunpack.c.l.b16 %v33
  %v54 = vunpack.c.l.b16 %v34
  %v55 = vunpack.c.l.b16 %v35
  %v56 = vpack.c.b16 %v53, %v52
  %v57 = vpack.c.b16 %v55, %v54
  %vm60 = vcmask 261120
  %v62 = vsel %vm60, %v47, 0
  %64 = vmatprep.subr.bf16.mxu0 0
  %65 = vmatpush1.bf16.msra.mxu0 %v56
  %66 = vmatprep.subr.bf16.mxu0 0
  %67 = vmatpush1.bf16.msra.mxu0 %v57
  %68 = vmatprep.subr.bf16.mxu0 0
  %69 = vmatpush1.bf16.msra.mxu0 0
  %70 = vmatprep.subr.bf16.mxu0 0
  %71 = vmatpush1.bf16.msra.mxu0 0
  %72 = vmatprep.subr.bf16.mxu0 0
  %73 = vmatpush1.bf16.msra.mxu0 0
  %74 = vmatprep.subr.bf16.mxu0 0
  %75 = vmatpush1.bf16.msra.mxu0 0
  %76 = vmatprep.subr.bf16.mxu0 0
  %77 = vmatpush1.bf16.msra.mxu0 0
  %78 = vmatprep.subr.bf16.mxu0 0
  %79 = vmatpush1.bf16.msra.mxu0 0
  %80 = vmatprep.subr.bf16.mxu0 0
  %81 = vmatpush1.bf16.msra.mxu0 0
  %82 = vmatprep.subr.bf16.mxu0 0
  %83 = vmatpush1.bf16.msra.mxu0 0
  %84 = vmatprep.subr.bf16.mxu0 0
  %85 = vmatpush1.bf16.msra.mxu0 0
  %86 = vmatprep.subr.bf16.mxu0 0
  %87 = vmatpush1.bf16.msra.mxu0 0
  %88 = vmatprep.subr.bf16.mxu0 0
  %89 = vmatpush1.bf16.msra.mxu0 0
  %90 = vmatprep.subr.bf16.mxu0 0
  %91 = vmatpush1.bf16.msra.mxu0 0
  %92 = vmatprep.subr.bf16.mxu0 0
  %93 = vmatpush1.bf16.msra.mxu0 0
  %94 = vmatprep.subr.bf16.mxu0 0
  %95 = vmatpush1.bf16.msra.mxu0 0
  %96 = vmatprep.mubr.bf16.mxu0 0
  %97 = vmatmul.mubr.bf16.gmra.mrb[0].mxu0 %v62
  %v98 = vpop.f32.mrb[0].mxu0
  %v99 = vadd.f32 %v41, %v98
  %v100 = vpop.f32.mrb[0].mxu0
  %v101 = vpop.f32.mrb[0].mxu0
  %v102 = vadd.f32 %v41, %v101
  %v103 = vpop.f32.mrb[0].mxu0
  %104 = vdwg.mxu0
  %v105 = vmax.f32 %v99, 0.0
  %v106 = vmax.f32 %v102, 0.0
  %v107 = vpack.c.bf16 %v106, %v105
  %v108 = vld [vmem:[%s4] sm:$0xf]
  %v109 = vld [vmem:[%s4 + $0x4] sm:$0xf]
  %v110 = vld [vmem:[%s5] sm:$0x1]
  %v112 = vlaneseq
  %v113 = vshrl.u32 %v112, 7
  %v114 = vsub.s32 0, %v113
  %v115 = vrot.slane %v110, %v114
  %v119 = vunpack.c.l.b16 %v108
  %v120 = vunpack.c.l.b16 %v109
  %v121 = vpack.c.b16 %v120, %v119
  %vm123 = vcmask 130048
  %v125 = vsel %vm123, %v107, 0
  %127 = vmatprep.subr.bf16.mxu0 0
  %128 = vmatpush1.bf16.msra.mxu0 %v121
  %129 = vmatprep.subr.bf16.mxu0 0
  %130 = vmatpush1.bf16.msra.mxu0 0
  %131 = vmatprep.subr.bf16.mxu0 0
  %132 = vmatpush1.bf16.msra.mxu0 0
  %133 = vmatprep.subr.bf16.mxu0 0
  %134 = vmatpush1.bf16.msra.mxu0 0
  %135 = vmatprep.subr.bf16.mxu0 0
  %136 = vmatpush1.bf16.msra.mxu0 0
  %137 = vmatprep.subr.bf16.mxu0 0
  %138 = vmatpush1.bf16.msra.mxu0 0
  %139 = vmatprep.subr.bf16.mxu0 0
  %140 = vmatpush1.bf16.msra.mxu0 0
  %141 = vmatprep.subr.bf16.mxu0 0
  %142 = vmatpush1.bf16.msra.mxu0 0
  %143 = vmatprep.subr.bf16.mxu0 0
  %144 = vmatpush1.bf16.msra.mxu0 0
  %145 = vmatprep.subr.bf16.mxu0 0
  %146 = vmatpush1.bf16.msra.mxu0 0
  %147 = vmatprep.subr.bf16.mxu0 0
  %148 = vmatpush1.bf16.msra.mxu0 0
  %149 = vmatprep.subr.bf16.mxu0 0
  %150 = vmatpush1.bf16.msra.mxu0 0
  %151 = vmatprep.subr.bf16.mxu0 0
  %152 = vmatpush1.bf16.msra.mxu0 0
  %153 = vmatprep.subr.bf16.mxu0 0
  %154 = vmatpush1.bf16.msra.mxu0 0
  %155 = vmatprep.subr.bf16.mxu0 0
  %156 = vmatpush1.bf16.msra.mxu0 0
  %157 = vmatprep.subr.bf16.mxu0 0
  %158 = vmatpush1.bf16.msra.mxu0 0
  %159 = vmatprep.mubr.bf16.mxu0 0
  %160 = vmatmul.mubr.bf16.gmra.mrb[0].mxu0 %v125
  %v161 = vpop.f32.mrb[0].mxu0
  %v162 = vadd.f32 %v115, %v161
  %v163 = vpop.f32.mrb[0].mxu0
  %v164 = vpop.f32.mrb[0].mxu0
  %v165 = vadd.f32 %v115, %v164
  %v166 = vpop.f32.mrb[0].mxu0
  %167 = vdwg.mxu0
  %v168 = vunpack.c.l.bf16 %v30
  %v169 = vunpack.c.l.bf16 %v31
  %v170 = vadd.f32 %v162, %v168
  %v171 = vadd.f32 %v165, %v169
  %v172 = vld [vmem:[%s1] sm:$0xf]
  %v173 = vld [vmem:[%s1 + $0x4] sm:$0xf]
  %v174 = vunpack.c.l.bf16 %v172
  %v175 = vunpack.c.l.bf16 %v173
  %v176 = vadd.f32 %v170, %v174
  %v177 = vadd.f32 %v171, %v175
  %v178 = vsel %vm60, %v176, 0.0
  %179 = vadd.xlane.f32.xlu0 %v178
  %v180 = vpop.xlane.xlu0 %179
  %v181 = vsel %vm60, %v177, 0.0
  %182 = vadd.xlane.f32.xlu0 %v181
  %v183 = vpop.xlane.xlu0 %182
  %v184 = vrcp.pop 32.0
  %v185 = vmul.f32 %v180, %v184
  %v186 = vmul.f32 %v183, %v184
  %v187 = vsub.f32 %v176, %v185
  %v188 = vsub.f32 %v177, %v186
  %v189 = vmul.f32 %v187, %v187
  %v190 = vmul.f32 %v188, %v188
  %v191 = vsel %vm60, %v189, 0.0
  %192 = vadd.xlane.f32.xlu0 %v191
  %v193 = vpop.xlane.xlu0 %192
  %v194 = vsel %vm60, %v190, 0.0
  %195 = vadd.xlane.f32.xlu0 %v194
  %v196 = vpop.xlane.xlu0 %195
  %v197 = vmul.f32 %v193, %v184
  %v198 = vmul.f32 %v196, %v184
  %v199 = vadd.f32 %v197, 1e-12
  %v200 = vadd.f32 %v198, 1e-12
  %v201 = vrsqrt.pop %v199
  %v202 = vrsqrt.pop %v200
  %v203 = vmul.f32 %v187, %v201
  %v204 = vmul.f32 %v188, %v202
  %v205 = vld [vmem:[%s6] sm:$0x1]
  %v207 = vlaneseq
  %v208 = vshrl.u32 %v207, 7
  %v209 = vsub.s32 0, %v208
  %v210 = vrot.slane %v205, %v209
  %v212 = vmul.f32 %v203, %v210
  %v213 = vmul.f32 %v204, %v210
  %v214 = vld [vmem:[%s7] sm:$0x1]
  %v216 = vlaneseq
  %v217 = vshrl.u32 %v216, 7
  %v218 = vsub.s32 0, %v217
  %v219 = vrot.slane %v214, %v218
  %v221 = vadd.f32 %v212, %v219
  %v222 = vadd.f32 %v213, %v219
  %v223 = vpack.c.bf16 %v222, %v221
  %v225 = vunpack.c.l.b16 %v223
  %v226 = vunpack.c.h.b16 %v223
  %v227 = vpack.c.b16 %v225, %v225
  %v228 = vpack.c.b16 %v226, %v226
  %vm231 = vcmask 257024
  %232 = vst.msk [vmem:[%s8] sm:$0xf] %vm231, %v227
  %233 = vst.msk [vmem:[%s8 + $0x4] sm:$0xf] %vm231, %v228
  // Predicated region
  $region34: #{adapter_bert_forward.19} parent=0 // pred_check
    _
  $region35: #{adapter_bert_forward.19} parent=0 // pred_check_branch
    %235 = sbr.rel (0) target = $region37
  $region36: #{adapter_bert_forward.19} parent=0 // pred_region
    _
  $region37: #{adapter_bert_forward.19} parent=0 // pred_fallthru
    _
  // Predicated region
  $region38: #{adapter_bert_forward.19} parent=0 // pred_check
    _
  $region39: #{adapter_bert_forward.19} parent=0 // pred_check_branch
    %237 = sbr.rel (0) target = $region41
  $region40: #{adapter_bert_forward.19} parent=0 // pred_region
    _
  $region41: #{adapter_bert_forward.19} parent=0 // pred_fallthru
    _

</llo_original>
